<compile_context>
chip_gen: v5e
topology: v5e:2x2
jax: 0.10.0
libtpu: 0.0.40
codegen_flags: <defaults>
</compile_context>

<pallas_src>
import numpy as np
import jax
import jax.numpy as jnp
from jax.experimental import pallas as pl
from jax.experimental.pallas import tpu as pltpu

K = 3            # conv kernel size
LEAKY_SLOPE = 0.1
BN_EPS = 1e-5


# -----------------------------------------------------------------------------
# Kernel 1: CondConv 3x3x3 conv as ONE im2col matmul per sample (MXU) plus
#           per-sample BatchNorm partial statistics.
#
# grid = (B,), fully "parallel": no cross-batch accumulation in-kernel, so the
# batch axis can be sharded across v7x's two TensorCores (perf feedback #4).
#
#   w_ref   : (Cout, 27*Cin)   combined per-sample weights      (lanes = 108)
#   pat_ref : (27*Cin, D*H*W)  im2col patches (built in wrapper) (lanes = 512)
#   y_ref   : (Cout, D*H*W)    conv output, f32                  (lanes = 512)
#
# The (Cout x DHW) orientation (instead of (DHW x Cout)) makes the MXU result
# land lane-dense: 4 full vregs / full-width stores instead of 64 vregs with
# only 8/128 lanes live.  Contraction dim is 108 (vs the previous 27 tiny K=4
# matmuls), so the whole conv is a single MXU pass per sample (feedback #1).
# -----------------------------------------------------------------------------
def conv_bnstats_kernel(w_ref, pat_ref, bias_ref, y_ref, sum_ref, ssq_ref):
    acc = jnp.dot(w_ref[...], pat_ref[...],
                  preferred_element_type=jnp.float32)       # (Cout, DHW), f32 acc
    acc = acc + bias_ref[...]                               # (Cout, 1) lane-broadcast
    y_ref[...] = acc
    # Per-sample partial stats; reduced across the batch in the wrapper so the
    # grid axis stays "parallel" (no racy in-kernel accumulator).
    sum_ref[...] = jnp.sum(acc, axis=1, keepdims=True)
    ssq_ref[...] = jnp.sum(acc * acc, axis=1, keepdims=True)


# -----------------------------------------------------------------------------
# Kernel 2: BatchNorm affine (pre-folded scale/shift, pre-tiled to the block) +
#           LeakyReLU(0.1) + nearest x2 upsample of D, H, W.
#
# grid = (B,) (was (B, D) = 16 steps -> now 2 steps; feedback #5), "parallel".
#
#   y_ref / scale_ref / shift_ref : (Cout*D, H*W)    rows=(c,d), lanes=(h,w)
#   dup_ref                       : (H*W, 4*H*W)     constant 0/1 matrix
#   o_ref                         : (Cout, 2D, 2H*2W) -> trailing (16, 256) tile
#
# The H/W duplication is done as a single MXU matmul against a 0/1 duplication
# matrix (exact, since each output is 1.0 * one input) — no cross-lane shuffles.
# The D duplication is a pure sublane row copy.  The output is fully lane-dense
# and already in NCDHW order (feedback #2 / #11).
# -----------------------------------------------------------------------------
def bn_act_upsample_kernel(y_ref, scale_ref, shift_ref, dup_ref, o_ref):
    cout, two_d, four_hw = o_ref.shape
    d = two_d // 2
    z = y_ref[...] * scale_ref[...] + shift_ref[...]        # BN affine (no broadcasts)
    z = jnp.where(z >= 0, z, LEAKY_SLOPE * z)               # LeakyReLU(0.1)
    u = jnp.dot(z, dup_ref[...],
                preferred_element_type=jnp.float32)         # (Cout*D, 4*H*W) H/W x2
    u = u.reshape(cout, d, four_hw)                         # free leading split
    o_ref[...] = jnp.broadcast_to(                          # D x2: row duplication
        u[:, :, None, :], (cout, d, 2, four_hw)).reshape(cout, two_d, four_hw)


# -----------------------------------------------------------------------------
# Glue: CondConv routing / expert mixing (tiny, num_experts=3) stays in plain JAX.
# -----------------------------------------------------------------------------
def cond_conv_combine(embedding, params):
    r = jax.nn.sigmoid(embedding @ params["route_w"].T + params["route_b"])   # (B, E)
    w = jnp.einsum("be,eoidhw->boidhw", r, params["experts_w"])               # (B,Cout,Cin,3,3,3)
    bias = r @ params["experts_b"]                                            # (B, Cout)
    return w, bias


def _upsample_dup_matrix(H, W):
    """0/1 matrix (H*W, 2H*2W) mapping each input lane to its 4 upsampled lanes."""
    hw = H * W
    q = jnp.arange(4 * hw)
    oh, ow = q // (2 * W), q % (2 * W)
    src = (oh // 2) * W + (ow // 2)
    return (src[None, :] == jnp.arange(hw)[:, None]).astype(jnp.float32)


def single_conv_up_forward(x_ncdhw, embedding, params, conv_dtype=jnp.float32):
    B, Cin, D, H, W = x_ncdhw.shape
    Cout = params["experts_w"].shape[1]
    DHW, HW = D * H * W, H * W
    KC = K * K * K * Cin

    # ---- CondConv routing / expert mixing (tiny) ----
    w, bias = cond_conv_combine(embedding, params)
    # (B,Cout,Cin,kd,kh,kw) -> (B,Cout,kd,kh,kw,Cin) -> (B, Cout, 27*Cin)
    w_t = jnp.transpose(w, (0, 1, 3, 4, 5, 2)).reshape(B, Cout, KC)

    # ---- im2col in the wrapper (also subsumes jnp.pad); channel-major, so the
    #      activation tensor is never transposed.  Row order = (tap, cin). ----
    xp = jnp.pad(x_ncdhw, ((0, 0), (0, 0), (1, 1), (1, 1), (1, 1)))
    taps = [xp[:, :, kd:kd + D, kh:kh + H, kw:kw + W]
            for kd in range(K) for kh in range(K) for kw in range(K)]
    pat = jnp.stack(taps, axis=1).reshape(B, KC, DHW)        # (B, 108, 512)

    # bf16 matmul operands (f32 accumulate) halve DMA bytes and double MXU rate on
    # v6e/v7x; pass conv_dtype=jnp.float32 on v5e / when tight accuracy is needed.
    w_t = w_t.astype(conv_dtype)
    pat = pat.astype(conv_dtype)
    bias3 = bias.reshape(B, Cout, 1).astype(jnp.float32)

    y, sums, ssq = pl.pallas_call(
        conv_bnstats_kernel,
        out_shape=(
            jax.ShapeDtypeStruct((B, Cout, DHW), jnp.float32),
            jax.ShapeDtypeStruct((B, Cout, 1), jnp.float32),
            jax.ShapeDtypeStruct((B, Cout, 1), jnp.float32),
        ),
        grid=(B,),
        in_specs=[
            pl.BlockSpec((None, Cout, KC), lambda b: (b, 0, 0)),
            pl.BlockSpec((None, KC, DHW), lambda b: (b, 0, 0)),
            pl.BlockSpec((None, Cout, 1), lambda b: (b, 0, 0)),
        ],
        out_specs=(
            pl.BlockSpec((None, Cout, DHW), lambda b: (b, 0, 0)),
            pl.BlockSpec((None, Cout, 1), lambda b: (b, 0, 0)),
            pl.BlockSpec((None, Cout, 1), lambda b: (b, 0, 0)),
        ),
        compiler_params=pltpu.CompilerParams(dimension_semantics=("parallel",)),
    )(w_t, pat, bias3)

    # ---- fold BatchNorm (batch statistics, biased variance) into scale/shift ----
    # NOTE: E[y^2] - mean^2 in f32 can cancel for large activation means; fine here.
    n = B * DHW
    mean = jnp.sum(sums, axis=0) / n                        # (Cout, 1)
    var = jnp.sum(ssq, axis=0) / n - mean * mean
    inv = jax.lax.rsqrt(var + BN_EPS)
    scale_c = params["bn_gamma"].reshape(Cout, 1) * inv
    shift_c = params["bn_beta"].reshape(Cout, 1) - mean * scale_c

    # Pre-tile scale/shift to the exact (Cout*D, H*W) block so the kernel does
    # pure full-width VPU ops with zero in-kernel broadcasts (feedback #9).
    scale_t = jnp.tile(jnp.repeat(scale_c[:, 0], D)[:, None], (1, HW))
    shift_t = jnp.tile(jnp.repeat(shift_c[:, 0], D)[:, None], (1, HW))
    dup = _upsample_dup_matrix(H, W)                        # (HW, 4*HW), constant

    y2 = y.reshape(B, Cout * D, HW)                         # rows=(c,d), lanes=(h,w)

    out = pl.pallas_call(
        bn_act_upsample_kernel,
        out_shape=jax.ShapeDtypeStruct((B, Cout, 2 * D, 4 * HW), jnp.float32),
        grid=(B,),
        in_specs=[
            pl.BlockSpec((None, Cout * D, HW), lambda b: (b, 0, 0)),
            pl.BlockSpec((Cout * D, HW), lambda b: (0, 0)),
            pl.BlockSpec((Cout * D, HW), lambda b: (0, 0)),
            pl.BlockSpec((HW, 4 * HW), lambda b: (0, 0)),
        ],
        out_specs=pl.BlockSpec((None, Cout, 2 * D, 4 * HW),
                               lambda b: (b, 0, 0, 0)),
        compiler_params=pltpu.CompilerParams(dimension_semantics=("parallel",)),
    )(y2, scale_t, shift_t, dup)

    # Free trailing-dim split: (B, Cout, 2D, 2H*2W) -> (B, Cout, 2D, 2H, 2W).
    # Output is already NCDHW — no final transpose needed.
    return out.reshape(B, Cout, 2 * D, 2 * H, 2 * W)


# -----------------------------------------------------------------------------
# Pure-JAX reference for correctness checking.
# -----------------------------------------------------------------------------
def reference_forward(x_ncdhw, embedding, params):
    w, bias = cond_conv_combine(embedding, params)
    x = jnp.transpose(x_ncdhw, (0, 2, 3, 4, 1))

    def conv_one(xi, wi, bi):
        w_dhwio = jnp.transpose(wi, (2, 3, 4, 1, 0))
        yi = jax.lax.conv_general_dilated(
            xi[None], w_dhwio, (1, 1, 1), "SAME",
            dimension_numbers=("NDHWC", "DHWIO", "NDHWC"))[0]
        return yi + bi

    y = jax.vmap(conv_one)(x, w, bias)
    mean = jnp.mean(y, axis=(0, 1, 2, 3))
    var = jnp.var(y, axis=(0, 1, 2, 3))
    z = (y - mean) / jnp.sqrt(var + BN_EPS) * params["bn_gamma"] + params["bn_beta"]
    z = jnp.where(z >= 0, z, LEAKY_SLOPE * z)
    z = jnp.repeat(jnp.repeat(jnp.repeat(z, 2, axis=1), 2, axis=2), 2, axis=3)
    return jnp.transpose(z, (0, 4, 1, 2, 3))


def init_params(key, in_ch, out_ch, num_experts, embeddings):
    ks = jax.random.split(key, 3)
    return {
        "experts_w": 0.1 * jax.random.normal(
            ks[0], (num_experts, out_ch, in_ch, K, K, K), jnp.float32),
        "experts_b": 0.1 * jax.random.normal(
            ks[1], (num_experts, out_ch), jnp.float32),
        "route_w": jax.random.normal(ks[2], (num_experts, embeddings), jnp.float32),
        "route_b": jnp.zeros((num_experts,), jnp.float32),
        "bn_gamma": jnp.ones((out_ch,), jnp.float32),
        "bn_beta": jnp.zeros((out_ch,), jnp.float32),
    }


if __name__ == "__main__":
    B, in_ch, out_ch = 2, 4, 8
    D = H = W = 8
    num_experts, embeddings = 3, 1

    key = jax.random.PRNGKey(0)
    kx, ke, kp = jax.random.split(key, 3)
    x = jax.random.normal(kx, (B, in_ch, D, H, W), jnp.float32)   # NCDHW like PyTorch
    emb = jax.random.normal(ke, (B, embeddings), jnp.float32)
    params = init_params(kp, in_ch, out_ch, num_experts, embeddings)

    fwd = jax.jit(single_conv_up_forward, static_argnames="conv_dtype")
    ref = reference_forward(x, emb, params)

    # f32 path: tight tolerance.
    out = jax.block_until_ready(fwd(x, emb, params, conv_dtype=jnp.float32))
    np.testing.assert_allclose(np.asarray(out), np.asarray(ref), atol=2e-3, rtol=2e-3)
    assert out.shape == (B, out_ch, 2 * D, 2 * H, 2 * W)

    # bf16 matmul-operand fast path (v6e/v7x): f32 accumulation, looser tolerance.
    out_bf16 = jax.block_until_ready(fwd(x, emb, params, conv_dtype=jnp.bfloat16))
    np.testing.assert_allclose(np.asarray(out_bf16), np.asarray(ref),
                               atol=3e-2, rtol=3e-2)

    print("KERNEL_OK")
</pallas_src>

<mosaic_0001>
module attributes {stable_mosaic.version = 11 : i64} {
  func.func @conv_bnstats_kernel(%arg0: i32, %arg1: memref<1x8x108xf32, #tpu.memory_space<vmem>>, %arg2: memref<1x108x512xf32, #tpu.memory_space<vmem>>, %arg3: memref<1x8x1xf32, #tpu.memory_space<vmem>>, %arg4: memref<1x8x512xf32, #tpu.memory_space<vmem>>, %arg5: memref<1x8x1xf32, #tpu.memory_space<vmem>>, %arg6: memref<1x8x1xf32, #tpu.memory_space<vmem>>) attributes {dimension_semantics = [#tpu.dimension_semantics<parallel>], iteration_bounds = array<i64: 2>, scalar_prefetch = 0 : i64, scratch_operands = 0 : i64, tpu.core_type = #tpu.core_type<tc>, window_params = [{transform_indices = @transform_0, window_bounds = array<i64: 1, 8, 108>}, {transform_indices = @transform_1, window_bounds = array<i64: 1, 108, 512>}, {transform_indices = @transform_2, window_bounds = array<i64: 1, 8, 1>}, {transform_indices = @transform_3, window_bounds = array<i64: 1, 8, 512>}, {transform_indices = @transform_4, window_bounds = array<i64: 1, 8, 1>}, {transform_indices = @transform_5, window_bounds = array<i64: 1, 8, 1>}]} {
    %c0 = arith.constant 0 : index
    %c0_0 = arith.constant 0 : index
    %c0_1 = arith.constant 0 : index
    %0 = vector.load %arg1[%c0, %c0_0, %c0_1] : memref<1x8x108xf32, #tpu.memory_space<vmem>>, vector<1x8x108xf32>
    %1 = vector.shape_cast %0 : vector<1x8x108xf32> to vector<8x108xf32>
    %c0_2 = arith.constant 0 : index
    %c0_3 = arith.constant 0 : index
    %c0_4 = arith.constant 0 : index
    %2 = vector.load %arg2[%c0_2, %c0_3, %c0_4] : memref<1x108x512xf32, #tpu.memory_space<vmem>>, vector<1x108x512xf32>
    %3 = vector.shape_cast %2 : vector<1x108x512xf32> to vector<108x512xf32>
    %cst = arith.constant dense<0.000000e+00> : vector<8x512xf32>
    %4 = tpu.matmul %1, %3, %cst {dimension_numbers = #tpu.dot_dimension_numbers<[1], [0], [0], [1], [0, 0, 1, 1], [], []>} : vector<8x108xf32>, vector<108x512xf32>, vector<8x512xf32> -> vector<8x512xf32>
    %c0_5 = arith.constant 0 : index
    %c0_6 = arith.constant 0 : index
    %c0_7 = arith.constant 0 : index
    %5 = vector.load %arg3[%c0_5, %c0_6, %c0_7] : memref<1x8x1xf32, #tpu.memory_space<vmem>>, vector<1x8x1xf32>
    %6 = vector.shape_cast %5 : vector<1x8x1xf32> to vector<8x1xf32>
    %7 = vector.broadcast %6 : vector<8x1xf32> to vector<8x512xf32>
    %8 = arith.addf %4, %7 : vector<8x512xf32>
    %c0_8 = arith.constant 0 : index
    %c0_9 = arith.constant 0 : index
    %c0_10 = arith.constant 0 : index
    %9 = vector.load %arg4[%c0_8, %c0_9, %c0_10] : memref<1x8x512xf32, #tpu.memory_space<vmem>>, vector<1x8x512xf32>
    %10 = vector.shape_cast %9 : vector<1x8x512xf32> to vector<8x512xf32>
    %11 = vector.shape_cast %8 : vector<8x512xf32> to vector<1x8x512xf32>
    tpu.vector_store %arg4[%c0_8, %c0_9, %c0_10], %11 {strides = array<i32>} : memref<1x8x512xf32, #tpu.memory_space<vmem>>, vector<1x8x512xf32>,
    %cst_11 = arith.constant dense<0.000000e+00> : vector<8xf32>
    %12 = vector.multi_reduction <add>, %8, %cst_11 [1] : vector<8x512xf32> to vector<8xf32>
    %13 = vector.shape_cast %12 : vector<8xf32> to vector<8x1xf32>
    %c0_12 = arith.constant 0 : index
    %c0_13 = arith.constant 0 : index
    %c0_14 = arith.constant 0 : index
    %14 = vector.load %arg5[%c0_12, %c0_13, %c0_14] : memref<1x8x1xf32, #tpu.memory_space<vmem>>, vector<1x8x1xf32>
    %15 = vector.shape_cast %14 : vector<1x8x1xf32> to vector<8x1xf32>
    %16 = vector.shape_cast %13 : vector<8x1xf32> to vector<1x8x1xf32>
    tpu.vector_store %arg5[%c0_12, %c0_13, %c0_14], %16 {strides = array<i32>} : memref<1x8x1xf32, #tpu.memory_space<vmem>>, vector<1x8x1xf32>,
    %17 = arith.mulf %8, %8 : vector<8x512xf32>
    %cst_15 = arith.constant dense<0.000000e+00> : vector<8xf32>
    %18 = vector.multi_reduction <add>, %17, %cst_15 [1] : vector<8x512xf32> to vector<8xf32>
    %19 = vector.shape_cast %18 : vector<8xf32> to vector<8x1xf32>
    %c0_16 = arith.constant 0 : index
    %c0_17 = arith.constant 0 : index
    %c0_18 = arith.constant 0 : index
    %20 = vector.load %arg6[%c0_16, %c0_17, %c0_18] : memref<1x8x1xf32, #tpu.memory_space<vmem>>, vector<1x8x1xf32>
    %21 = vector.shape_cast %20 : vector<1x8x1xf32> to vector<8x1xf32>
    %22 = vector.shape_cast %19 : vector<8x1xf32> to vector<1x8x1xf32>
    tpu.vector_store %arg6[%c0_16, %c0_17, %c0_18], %22 {strides = array<i32>} : memref<1x8x1xf32, #tpu.memory_space<vmem>>, vector<1x8x1xf32>,
    return
  }
  func.func @transform_0(%arg0: i32) -> (i32, i32, i32) {
    %c0_i32 = arith.constant 0 : i32
    %c0_i32_0 = arith.constant 0 : i32
    %c0_i32_1 = arith.constant 0 : i32
    return %arg0, %c0_i32, %c0_i32_0 : i32, i32, i32
  }
  func.func @transform_1(%arg0: i32) -> (i32, i32, i32) {
    %c0_i32 = arith.constant 0 : i32
    %c0_i32_0 = arith.constant 0 : i32
    %c0_i32_1 = arith.constant 0 : i32
    return %arg0, %c0_i32, %c0_i32_0 : i32, i32, i32
  }
  func.func @transform_2(%arg0: i32) -> (i32, i32, i32) {
    %c0_i32 = arith.constant 0 : i32
    %c0_i32_0 = arith.constant 0 : i32
    %c0_i32_1 = arith.constant 0 : i32
    return %arg0, %c0_i32, %c0_i32_0 : i32, i32, i32
  }
  func.func @transform_3(%arg0: i32) -> (i32, i32, i32) {
    %c0_i32 = arith.constant 0 : i32
    %c0_i32_0 = arith.constant 0 : i32
    %c0_i32_1 = arith.constant 0 : i32
    return %arg0, %c0_i32, %c0_i32_0 : i32, i32, i32
  }
  func.func @transform_4(%arg0: i32) -> (i32, i32, i32) {
    %c0_i32 = arith.constant 0 : i32
    %c0_i32_0 = arith.constant 0 : i32
    %c0_i32_1 = arith.constant 0 : i32
    return %arg0, %c0_i32, %c0_i32_0 : i32, i32, i32
  }
  func.func @transform_5(%arg0: i32) -> (i32, i32, i32) {
    %c0_i32 = arith.constant 0 : i32
    %c0_i32_0 = arith.constant 0 : i32
    %c0_i32_1 = arith.constant 0 : i32
    return %arg0, %c0_i32, %c0_i32_0 : i32, i32, i32
  }
}

module attributes {stable_mosaic.version = 11 : i64} {
  func.func @bn_act_upsample_kernel(%arg0: i32, %arg1: memref<1x64x64xf32, #tpu.memory_space<vmem>>, %arg2: memref<64x64xf32, #tpu.memory_space<vmem>>, %arg3: memref<64x64xf32, #tpu.memory_space<vmem>>, %arg4: memref<64x256xf32, #tpu.memory_space<vmem>>, %arg5: memref<1x8x16x256xf32, #tpu.memory_space<vmem>>) attributes {dimension_semantics = [#tpu.dimension_semantics<parallel>], iteration_bounds = array<i64: 2>, scalar_prefetch = 0 : i64, scratch_operands = 0 : i64, tpu.core_type = #tpu.core_type<tc>, window_params = [{transform_indices = @transform_0, window_bounds = array<i64: 1, 64, 64>}, {pipeline_mode = #tpu.pipeline_mode<synchronous>, transform_indices = @transform_1, window_bounds = array<i64: 64, 64>}, {pipeline_mode = #tpu.pipeline_mode<synchronous>, transform_indices = @transform_2, window_bounds = array<i64: 64, 64>}, {pipeline_mode = #tpu.pipeline_mode<synchronous>, transform_indices = @transform_3, window_bounds = array<i64: 64, 256>}, {transform_indices = @transform_4, window_bounds = array<i64: 1, 8, 16, 256>}]} {
    %c0 = arith.constant 0 : index
    %c0_0 = arith.constant 0 : index
    %c0_1 = arith.constant 0 : index
    %0 = vector.load %arg1[%c0, %c0_0, %c0_1] : memref<1x64x64xf32, #tpu.memory_space<vmem>>, vector<1x64x64xf32>
    %1 = vector.shape_cast %0 : vector<1x64x64xf32> to vector<64x64xf32>
    %c0_2 = arith.constant 0 : index
    %c0_3 = arith.constant 0 : index
    %2 = vector.load %arg2[%c0_2, %c0_3] : memref<64x64xf32, #tpu.memory_space<vmem>>, vector<64x64xf32>
    %3 = arith.mulf %1, %2 : vector<64x64xf32>
    %c0_4 = arith.constant 0 : index
    %c0_5 = arith.constant 0 : index
    %4 = vector.load %arg3[%c0_4, %c0_5] : memref<64x64xf32, #tpu.memory_space<vmem>>, vector<64x64xf32>
    %5 = arith.addf %3, %4 : vector<64x64xf32>
    %cst = arith.constant 0.000000e+00 : f32
    %6 = vector.broadcast %cst : f32 to vector<64x64xf32>
    %7 = arith.cmpf oge, %5, %6 : vector<64x64xf32>
    %cst_6 = arith.constant 1.000000e-01 : f32
    %8 = vector.broadcast %cst_6 : f32 to vector<64x64xf32>
    %9 = arith.mulf %8, %5 : vector<64x64xf32>
    %10 = arith.select %7, %5, %9 : vector<64x64xi1>, vector<64x64xf32>
    %c0_7 = arith.constant 0 : index
    %c0_8 = arith.constant 0 : index
    %11 = vector.load %arg4[%c0_7, %c0_8] : memref<64x256xf32, #tpu.memory_space<vmem>>, vector<64x256xf32>
    %cst_9 = arith.constant dense<0.000000e+00> : vector<64x256xf32>
    %12 = tpu.matmul %10, %11, %cst_9 {dimension_numbers = #tpu.dot_dimension_numbers<[1], [0], [0], [1], [0, 0, 1, 1], [], []>} : vector<64x64xf32>, vector<64x256xf32>, vector<64x256xf32> -> vector<64x256xf32>
    %13 = vector.shape_cast %12 : vector<64x256xf32> to vector<8x8x256xf32>
    %14 = vector.shape_cast %13 : vector<8x8x256xf32> to vector<8x8x1x256xf32>
    %15 = vector.shape_cast %14 : vector<8x8x1x256xf32> to vector<8x8x1x256xf32>
    %16 = vector.broadcast %15 : vector<8x8x1x256xf32> to vector<8x8x2x256xf32>
    %17 = vector.shape_cast %16 : vector<8x8x2x256xf32> to vector<8x16x256xf32>
    %c0_10 = arith.constant 0 : index
    %c0_11 = arith.constant 0 : index
    %c0_12 = arith.constant 0 : index
    %c0_13 = arith.constant 0 : index
    %18 = vector.load %arg5[%c0_10, %c0_11, %c0_12, %c0_13] : memref<1x8x16x256xf32, #tpu.memory_space<vmem>>, vector<1x8x16x256xf32>
    %19 = vector.shape_cast %18 : vector<1x8x16x256xf32> to vector<8x16x256xf32>
    %20 = vector.shape_cast %17 : vector<8x16x256xf32> to vector<1x8x16x256xf32>
    tpu.vector_store %arg5[%c0_10, %c0_11, %c0_12, %c0_13], %20 {strides = array<i32>} : memref<1x8x16x256xf32, #tpu.memory_space<vmem>>, vector<1x8x16x256xf32>,
    return
  }
  func.func @transform_0(%arg0: i32) -> (i32, i32, i32) {
    %c0_i32 = arith.constant 0 : i32
    %c0_i32_0 = arith.constant 0 : i32
    %c0_i32_1 = arith.constant 0 : i32
    return %arg0, %c0_i32, %c0_i32_0 : i32, i32, i32
  }
  func.func @transform_1(%arg0: i32) -> (i32, i32) {
    %c0_i32 = arith.constant 0 : i32
    %c0_i32_0 = arith.constant 0 : i32
    %c0_i32_1 = arith.constant 0 : i32
    return %c0_i32, %c0_i32_0 : i32, i32
  }
  func.func @transform_2(%arg0: i32) -> (i32, i32) {
    %c0_i32 = arith.constant 0 : i32
    %c0_i32_0 = arith.constant 0 : i32
    %c0_i32_1 = arith.constant 0 : i32
    return %c0_i32, %c0_i32_0 : i32, i32
  }
  func.func @transform_3(%arg0: i32) -> (i32, i32) {
    %c0_i32 = arith.constant 0 : i32
    %c0_i32_0 = arith.constant 0 : i32
    %c0_i32_1 = arith.constant 0 : i32
    return %c0_i32, %c0_i32_0 : i32, i32
  }
  func.func @transform_4(%arg0: i32) -> (i32, i32, i32, i32) {
    %c0_i32 = arith.constant 0 : i32
    %c0_i32_0 = arith.constant 0 : i32
    %c0_i32_1 = arith.constant 0 : i32
    %c0_i32_2 = arith.constant 0 : i32
    return %arg0, %c0_i32, %c0_i32_0, %c0_i32_1 : i32, i32, i32, i32
  }
}

</mosaic_0001>

<llo_original>
// kernel: single_conv_up_forward.2
$region0: #{single_conv_up_forward.2}
  #allocation0 [shape = 'u32[]', space=smem, size = 0x4, offset = 0x4, fixed_abs, tag = 'smem constant byte address 0x4 - core index']
  #allocation1 [shape = 'u32[72,128]{1,0:T(1,128)}', space=vmem, size = 0x9000, scoped, tag = 'internal scratch']
  %s0 = inlined_call_operand.vmem [shape: f32[2,8,108], index: 0, kind: input, shape index: {}]
  %s1 = inlined_call_operand.vmem [shape: f32[2,108,512], index: 1, kind: input, shape index: {}]
  %s2 = inlined_call_operand.vmem [shape: f32[2,8,1], index: 2, kind: input, shape index: {}]
  %s3 = inlined_call_operand.vmem [shape: f32[2,8,512], index: 3, kind: output, shape index: {0}]
  %s4 = inlined_call_operand.vmem [shape: f32[2,8,1], index: 4, kind: output, shape index: {1}]
  %s5 = inlined_call_operand.vmem [shape: f32[2,8,1], index: 5, kind: output, shape index: {2}]
  %6 = xla_tuple %s3, %s4, %s5
  %s7 = sld [smem:[#allocation0]]
  $region61: #{single_conv_up_forward.2} parent=0
    _
  %s9 = ssub.s32 1, %s7
  %s10 = scalar_select 0, %s9, %s7
  loop: start=0, step=1, limit=4
  $region2: #{single_conv_up_forward.2} parent=0 // loop_pre_header
    _
  $region3: #{single_conv_up_forward.2} parent=0 // loop_header
    %s12 = sphi 0, %s16
    %p13 = scmp.ge.s32.totalorder %s12, 4
    %s22 = sphi 0, %s24
    %s25 = sphi 0, %s22
    %s26 = sphi 0, %s25
    %s42 = sphi 0, %s26
    %s48 = sphi 0, %s50
    %s51 = sphi 0, %s48
    %s52 = sphi 0, %s51
    %s68 = sphi 0, %s52
    %s74 = sphi 0, %s76
    %s77 = sphi 0, %s74
    %s78 = sphi 0, %s77
    %s94 = sphi 0, %s78
    %s100 = sphi 0, %s102
    %s103 = sphi 0, %s100
    %s104 = sphi 0, %s103
    %s120 = sphi 0, %s104
    %s126 = sphi 0, %s128
    %s129 = sphi 0, %s126
    %s130 = sphi 0, %s129
    %s146 = sphi 0, %s130
    %s152 = sphi 0, %s154
    %s155 = sphi 0, %s152
    %s156 = sphi 0, %s155
    %s172 = sphi 0, %s156
  $region4: #{single_conv_up_forward.2} parent=0 // loop_header_branch
    %15 = sbr.rel (%p13) target = $region8
  $region5: #{single_conv_up_forward.2} parent=0 // loop_body
    %s17 = ssub.s32 %s12, 1
    %s18 = ssub.s32 %s12, 2
    %s19 = sadd.s32 %s12, 1
    %s20 = ssub.s32 %s12, %s19
    %p21 = scmp.eq.s32.totalorder %s20, 0
    %s23 = sadd.s32 %s22, 1
    %s24 = scalar_select %p21, %s22, %s23
    %p27 = pneg %p21
    %p28 = scmp.eq.s32.totalorder %s12, 1
    %p29 = por %p27, %p28
    %p30 = scmp.ne.s32.totalorder %s22, %s25
    %p31 = scmp.eq.s32.totalorder %s12, 0
    %p32 = por %p30, %p31
    %p33 = scmp.ne.s32.totalorder %s22, %s25
    %p34 = scmp.eq.s32.totalorder %s17, 1
    %p35 = por %p33, %p34
    %p36 = scmp.ne.s32.totalorder %s25, %s26
    %p37 = scmp.eq.s32.totalorder %s17, 0
    %p38 = por %p36, %p37
    %p39 = scmp.ne.s32.totalorder %s25, %s26
    %p40 = scmp.eq.s32.totalorder %s18, 1
    %p41 = por %p39, %p40
    %p43 = scmp.ne.s32.totalorder %s26, %s42
    %p44 = scmp.eq.s32.totalorder %s18, 0
    %p45 = por %p43, %p44
    %s46 = ssub.s32 %s12, %s19
    %p47 = scmp.eq.s32.totalorder %s46, 0
    %s49 = sadd.s32 %s48, 1
    %s50 = scalar_select %p47, %s48, %s49
    %p53 = pneg %p47
    %p54 = scmp.eq.s32.totalorder %s12, 1
    %p55 = por %p53, %p54
    %p56 = scmp.ne.s32.totalorder %s48, %s51
    %p57 = scmp.eq.s32.totalorder %s12, 0
    %p58 = por %p56, %p57
    %p59 = scmp.ne.s32.totalorder %s48, %s51
    %p60 = scmp.eq.s32.totalorder %s17, 1
    %p61 = por %p59, %p60
    %p62 = scmp.ne.s32.totalorder %s51, %s52
    %p63 = scmp.eq.s32.totalorder %s17, 0
    %p64 = por %p62, %p63
    %p65 = scmp.ne.s32.totalorder %s51, %s52
    %p66 = scmp.eq.s32.totalorder %s18, 1
    %p67 = por %p65, %p66
    %p69 = scmp.ne.s32.totalorder %s52, %s68
    %p70 = scmp.eq.s32.totalorder %s18, 0
    %p71 = por %p69, %p70
    %s72 = ssub.s32 %s12, %s19
    %p73 = scmp.eq.s32.totalorder %s72, 0
    %s75 = sadd.s32 %s74, 1
    %s76 = scalar_select %p73, %s74, %s75
    %p79 = pneg %p73
    %p80 = scmp.eq.s32.totalorder %s12, 1
    %p81 = por %p79, %p80
    %p82 = scmp.ne.s32.totalorder %s74, %s77
    %p83 = scmp.eq.s32.totalorder %s12, 0
    %p84 = por %p82, %p83
    %p85 = scmp.ne.s32.totalorder %s74, %s77
    %p86 = scmp.eq.s32.totalorder %s17, 1
    %p87 = por %p85, %p86
    %p88 = scmp.ne.s32.totalorder %s77, %s78
    %p89 = scmp.eq.s32.totalorder %s17, 0
    %p90 = por %p88, %p89
    %p91 = scmp.ne.s32.totalorder %s77, %s78
    %p92 = scmp.eq.s32.totalorder %s18, 1
    %p93 = por %p91, %p92
    %p95 = scmp.ne.s32.totalorder %s78, %s94
    %p96 = scmp.eq.s32.totalorder %s18, 0
    %p97 = por %p95, %p96
    %s98 = ssub.s32 %s12, %s19
    %p99 = scmp.eq.s32.totalorder %s98, 0
    %s101 = sadd.s32 %s100, 1
    %s102 = scalar_select %p99, %s100, %s101
    %p105 = pneg %p99
    %p106 = scmp.eq.s32.totalorder %s12, 1
    %p107 = por %p105, %p106
    %p108 = scmp.ne.s32.totalorder %s100, %s103
    %p109 = scmp.eq.s32.totalorder %s12, 0
    %p110 = por %p108, %p109
    %p111 = scmp.ne.s32.totalorder %s100, %s103
    %p112 = scmp.eq.s32.totalorder %s17, 1
    %p113 = por %p111, %p112
    %p114 = scmp.ne.s32.totalorder %s103, %s104
    %p115 = scmp.eq.s32.totalorder %s17, 0
    %p116 = por %p114, %p115
    %p117 = scmp.ne.s32.totalorder %s103, %s104
    %p118 = scmp.eq.s32.totalorder %s18, 1
    %p119 = por %p117, %p118
    %p121 = scmp.ne.s32.totalorder %s104, %s120
    %p122 = scmp.eq.s32.totalorder %s18, 0
    %p123 = por %p121, %p122
    %s124 = ssub.s32 %s12, %s19
    %p125 = scmp.eq.s32.totalorder %s124, 0
    %s127 = sadd.s32 %s126, 1
    %s128 = scalar_select %p125, %s126, %s127
    %p131 = pneg %p125
    %p132 = scmp.eq.s32.totalorder %s12, 1
    %p133 = por %p131, %p132
    %p134 = scmp.ne.s32.totalorder %s126, %s129
    %p135 = scmp.eq.s32.totalorder %s12, 0
    %p136 = por %p134, %p135
    %p137 = scmp.ne.s32.totalorder %s126, %s129
    %p138 = scmp.eq.s32.totalorder %s17, 1
    %p139 = por %p137, %p138
    %p140 = scmp.ne.s32.totalorder %s129, %s130
    %p141 = scmp.eq.s32.totalorder %s17, 0
    %p142 = por %p140, %p141
    %p143 = scmp.ne.s32.totalorder %s129, %s130
    %p144 = scmp.eq.s32.totalorder %s18, 1
    %p145 = por %p143, %p144
    %p147 = scmp.ne.s32.totalorder %s130, %s146
    %p148 = scmp.eq.s32.totalorder %s18, 0
    %p149 = por %p147, %p148
    %s150 = ssub.s32 %s12, %s19
    %p151 = scmp.eq.s32.totalorder %s150, 0
    %s153 = sadd.s32 %s152, 1
    %s154 = scalar_select %p151, %s152, %s153
    %p157 = pneg %p151
    %p158 = scmp.eq.s32.totalorder %s12, 1
    %p159 = por %p157, %p158
    %p160 = scmp.ne.s32.totalorder %s152, %s155
    %p161 = scmp.eq.s32.totalorder %s12, 0
    %p162 = por %p160, %p161
    %p163 = scmp.ne.s32.totalorder %s152, %s155
    %p164 = scmp.eq.s32.totalorder %s17, 1
    %p165 = por %p163, %p164
    %p166 = scmp.ne.s32.totalorder %s155, %s156
    %p167 = scmp.eq.s32.totalorder %s17, 0
    %p168 = por %p166, %p167
    %p169 = scmp.ne.s32.totalorder %s155, %s156
    %p170 = scmp.eq.s32.totalorder %s18, 1
    %p171 = por %p169, %p170
    %p173 = scmp.ne.s32.totalorder %s156, %s172
    %p174 = scmp.eq.s32.totalorder %s18, 0
    %p175 = por %p173, %p174
    %p176 = scmp.le.s32.totalorder 1, %s12
    %p177 = scmp.lt.s32.totalorder %s12, 3
    %p178 = pnand %p176, %p177
    %p179 = pneg %p178
    // Predicated region
    $region9: #{single_conv_up_forward.2} parent=5 // pred_check
      _
    $region10: #{single_conv_up_forward.2} parent=5 // pred_check_branch
      %181 = sbr.rel (%p178) target = $region12
    $region11: #{single_conv_up_forward.2} parent=5 // pred_region
      %s182 = ssub.s32 %s12, 1
    $region12: #{single_conv_up_forward.2} parent=5 // pred_fallthru
      _
    %p183 = scmp.lt.s32.totalorder %s12, 2
    // Predicated region
    $region13: #{single_conv_up_forward.2} parent=5 // pred_check
      %p184 = pneg %p183
    $region14: #{single_conv_up_forward.2} parent=5 // pred_check_branch
      %186 = sbr.rel (%p184) target = $region16
    $region15: #{single_conv_up_forward.2} parent=5 // pred_region
      // Predicated region
      $region17: #{single_conv_up_forward.2} parent=15 // pred_check
        %p187 = pneg %p32
      $region18: #{single_conv_up_forward.2} parent=15 // pred_check_branch
        %189 = sbr.rel (%p187) target = $region20
      $region19: #{single_conv_up_forward.2} parent=15 // pred_region
        %p190 = scmp.lt.s32.totalorder %s12, 1
        %s191 = scalar_select %p190, %s12, 1
        %s192 = smul.addr %s191, 8
        %s193 = scalar_lea.vmem %s0, %s192
      $region20: #{single_conv_up_forward.2} parent=15 // pred_fallthru
        _
      // Predicated region
      $region21: #{single_conv_up_forward.2} parent=15 // pred_check
        %p194 = pneg %p58
      $region22: #{single_conv_up_forward.2} parent=15 // pred_check_branch
        %196 = sbr.rel (%p194) target = $region24
      $region23: #{single_conv_up_forward.2} parent=15 // pred_region
        %p197 = scmp.lt.s32.totalorder %s12, 1
        %s198 = scalar_select %p197, %s12, 1
        %s199 = smul.addr %s198, 56
        %s200 = smul.addr %s199, 8
        %s201 = scalar_lea.vmem %s1, %s200
      $region24: #{single_conv_up_forward.2} parent=15 // pred_fallthru
        _
      // Predicated region
      $region25: #{single_conv_up_forward.2} parent=15 // pred_check
        %p202 = pneg %p84
      $region26: #{single_conv_up_forward.2} parent=15 // pred_check_branch
        %204 = sbr.rel (%p202) target = $region28
      $region27: #{single_conv_up_forward.2} parent=15 // pred_region
        %p205 = scmp.lt.s32.totalorder %s12, 1
        %s206 = scalar_select %p205, %s12, 1
        %s207 = smul.addr %s206, 8
        %s208 = scalar_lea.vmem %s2, %s207
      $region28: #{single_conv_up_forward.2} parent=15 // pred_fallthru
        _
    $region16: #{single_conv_up_forward.2} parent=5 // pred_fallthru
      _
    %p209 = scmp.le.s32.totalorder 1, %s12
    %p210 = scmp.lt.s32.totalorder %s12, 3
    %p211 = pnand %p209, %p210
    %p212 = pneg %p211
    // Predicated region
    $region29: #{single_conv_up_forward.2} parent=5 // pred_check
      _
    $region30: #{single_conv_up_forward.2} parent=5 // pred_check_branch
      %214 = sbr.rel (%p211) target = $region32
    $region31: #{single_conv_up_forward.2} parent=5 // pred_region
      %s215 = ssub.s32 %s12, 1
      %p216 = scmp.lt.s32.totalorder %s17, 1
      %s217 = scalar_select %p216, %s17, 1
      %s218 = smul.addr %s217, 8
      %s219 = scalar_lea.vmem %s0, %s218
      %p220 = pneg %p38
      %p221 = pneg %p35
      %p222 = scmp.lt.s32.totalorder %s17, 1
      %s223 = scalar_select %p222, %s17, 1
      %s224 = smul.addr %s223, 56
      %s225 = smul.addr %s224, 8
      %s226 = scalar_lea.vmem %s1, %s225
      %p227 = pneg %p64
      %p228 = pneg %p61
      %p229 = scmp.lt.s32.totalorder %s17, 1
      %s230 = scalar_select %p229, %s17, 1
      %s231 = smul.addr %s230, 8
      %s232 = scalar_lea.vmem %s2, %s231
      %p233 = pneg %p90
      %p234 = pneg %p87
      %p235 = pneg %p116
      %p236 = pneg %p113
      %p237 = scmp.lt.s32.totalorder %s17, 1
      %s238 = scalar_select %p237, %s17, 1
      %s239 = smul.addr %s238, 4
      %s240 = smul.addr %s239, 8
      %s241 = scalar_lea.vmem %s3, %s240
      %p242 = pneg %p142
      %p243 = pneg %p139
      %p244 = scmp.lt.s32.totalorder %s17, 1
      %s245 = scalar_select %p244, %s17, 1
      %s246 = smul.addr %s245, 8
      %s247 = scalar_lea.vmem %s4, %s246
      %p248 = pneg %p168
      %p249 = pneg %p165
      %p250 = scmp.lt.s32.totalorder %s17, 1
      %s251 = scalar_select %p250, %s17, 1
      %s252 = smul.addr %s251, 8
      %s253 = scalar_lea.vmem %s5, %s252
      %p254 = scmp.lt.s32.totalorder %s17, 1
      %s255 = scalar_select %p254, %s17, 1
      %s256 = smul.addr %s255, 8
      %s257 = scalar_lea.vmem %s0, %s256
      %p258 = scmp.lt.s32.totalorder %s17, 1
      %s259 = scalar_select %p258, %s17, 1
      %s260 = smul.addr %s259, 56
      %s261 = smul.addr %s260, 8
      %s262 = scalar_lea.vmem %s1, %s261
      %p263 = scmp.lt.s32.totalorder %s17, 1
      %s264 = scalar_select %p263, %s17, 1
      %s265 = smul.addr %s264, 8
      %s266 = scalar_lea.vmem %s2, %s265
      %p267 = scmp.lt.s32.totalorder %s17, 1
      %s268 = scalar_select %p267, %s17, 1
      %s269 = smul.addr %s268, 4
      %s270 = smul.addr %s269, 8
      %s271 = scalar_lea.vmem %s3, %s270
      %p272 = scmp.lt.s32.totalorder %s17, 1
      %s273 = scalar_select %p272, %s17, 1
      %s274 = smul.addr %s273, 8
      %s275 = scalar_lea.vmem %s4, %s274
      %p276 = scmp.lt.s32.totalorder %s17, 1
      %s277 = scalar_select %p276, %s17, 1
      %s278 = smul.addr %s277, 8
      %s279 = scalar_lea.vmem %s5, %s278
      %v280 = vld [vmem:[%s257] sm:$0xff]
      %v281 = vld [vmem:[%s262] sm:$0xff]
      %v282 = vld [vmem:[%s262 + $0x8] sm:$0xff]
      %v283 = vld [vmem:[%s262 + $0x10] sm:$0xff]
      %v284 = vld [vmem:[%s262 + $0x18] sm:$0xff]
      %v285 = vld [vmem:[%s262 + $0x20] sm:$0xff]
      %v286 = vld [vmem:[%s262 + $0x28] sm:$0xff]
      %v287 = vld [vmem:[%s262 + $0x30] sm:$0xff]
      %v288 = vld [vmem:[%s262 + $0x38] sm:$0xff]
      %v289 = vld [vmem:[%s262 + $0x40] sm:$0xff]
      %v290 = vld [vmem:[%s262 + $0x48] sm:$0xff]
      %v291 = vld [vmem:[%s262 + $0x50] sm:$0xff]
      %v292 = vld [vmem:[%s262 + $0x58] sm:$0xff]
      %v293 = vld [vmem:[%s262 + $0x60] sm:$0xff]
      %v294 = vld [vmem:[%s262 + $0x68] sm:$0xff]
      %v295 = vld [vmem:[%s262 + $0x70] sm:$0xff]
      %v296 = vld [vmem:[%s262 + $0x78] sm:$0xff]
      %v297 = vld [vmem:[%s262 + $0x80] sm:$0xff]
      %v298 = vld [vmem:[%s262 + $0x88] sm:$0xff]
      %v299 = vld [vmem:[%s262 + $0x90] sm:$0xff]
      %v300 = vld [vmem:[%s262 + $0x98] sm:$0xff]
      %v301 = vld [vmem:[%s262 + $0xa0] sm:$0xff]
      %v302 = vld [vmem:[%s262 + $0xa8] sm:$0xff]
      %v303 = vld [vmem:[%s262 + $0xb0] sm:$0xff]
      %v304 = vld [vmem:[%s262 + $0xb8] sm:$0xff]
      %v305 = vld [vmem:[%s262 + $0xc0] sm:$0xff]
      %v306 = vld [vmem:[%s262 + $0xc8] sm:$0xff]
      %v307 = vld [vmem:[%s262 + $0xd0] sm:$0xff]
      %v308 = vld [vmem:[%s262 + $0xd8] sm:$0xff]
      %v309 = vld [vmem:[%s262 + $0xe0] sm:$0xff]
      %v310 = vld [vmem:[%s262 + $0xe8] sm:$0xff]
      %v311 = vld [vmem:[%s262 + $0xf0] sm:$0xff]
      %v312 = vld [vmem:[%s262 + $0xf8] sm:$0xff]
      %v313 = vld [vmem:[%s262 + $0x100] sm:$0xff]
      %v314 = vld [vmem:[%s262 + $0x108] sm:$0xff]
      %v315 = vld [vmem:[%s262 + $0x110] sm:$0xff]
      %v316 = vld [vmem:[%s262 + $0x118] sm:$0xff]
      %v317 = vld [vmem:[%s262 + $0x120] sm:$0xff]
      %v318 = vld [vmem:[%s262 + $0x128] sm:$0xff]
      %v319 = vld [vmem:[%s262 + $0x130] sm:$0xff]
      %v320 = vld [vmem:[%s262 + $0x138] sm:$0xff]
      %v321 = vld [vmem:[%s262 + $0x140] sm:$0xff]
      %v322 = vld [vmem:[%s262 + $0x148] sm:$0xff]
      %v323 = vld [vmem:[%s262 + $0x150] sm:$0xff]
      %v324 = vld [vmem:[%s262 + $0x158] sm:$0xff]
      %v325 = vld [vmem:[%s262 + $0x160] sm:$0xff]
      %v326 = vld [vmem:[%s262 + $0x168] sm:$0xff]
      %v327 = vld [vmem:[%s262 + $0x170] sm:$0xff]
      %v328 = vld [vmem:[%s262 + $0x178] sm:$0xff]
      %v329 = vld [vmem:[%s262 + $0x180] sm:$0xff]
      %v330 = vld [vmem:[%s262 + $0x188] sm:$0xff]
      %v331 = vld [vmem:[%s262 + $0x190] sm:$0xff]
      %v332 = vld [vmem:[%s262 + $0x198] sm:$0xff]
      %v333 = vld [vmem:[%s262 + $0x1a0] sm:$0xf]
      %v334 = vld [vmem:[%s262 + $0x1a8] sm:$0xf]
      %v335 = vld [vmem:[%s262 + $0x1b0] sm:$0xf]
      %v336 = vld [vmem:[%s262 + $0x1b8] sm:$0xf]
      %v337 = vld [vmem:[%s266] sm:$0xff]
      %339 = vset.pattern.permute.xlu0 0
      %340 = vperm.xlu0 %339, %v337
      %v341 = vpop.permute.xlu0 %340
      %vm343 = vcmask 883712
      %v345 = vsel %vm343, %v280, 0
      %vm347 = vcmask 1043456
      %v349 = vsel %vm347, %v333, 0
      %v352 = vsel %vm347, %v334, 0
      %v355 = vsel %vm347, %v335, 0
      %v358 = vsel %vm347, %v336, 0
      %360 = vmatpush.msra.mxu0 0.0
      %361 = vmatpush.msra.mxu0 0.0
      %362 = vmatpush.msra.mxu0 %v349
      %363 = vmatpush.msra.mxu0 %v329
      %364 = vmatpush.msra.mxu0 %v325
      %365 = vmatpush.msra.mxu0 %v321
      %366 = vmatpush.msra.mxu0 %v317
      %367 = vmatpush.msra.mxu0 %v313
      %368 = vmatpush.msra.mxu0 %v309
      %369 = vmatpush.msra.mxu0 %v305
      %370 = vmatpush.msra.mxu0 %v301
      %371 = vmatpush.msra.mxu0 %v297
      %372 = vmatpush.msra.mxu0 %v293
      %373 = vmatpush.msra.mxu0 %v289
      %374 = vmatpush.msra.mxu0 %v285
      %375 = vmatpush.msra.mxu0 %v281
      %376 = vmatmul.f32.gmra.mxu0 %v345
      %v377 = vpop.f32.mrf.mxu0
      %v378 = vadd.f32 %v341, %v377
      %379 = vdwg.mxu0
      %380 = vmatpush.msra.mxu0 0.0
      %381 = vmatpush.msra.mxu0 0.0
      %382 = vmatpush.msra.mxu0 %v352
      %383 = vmatpush.msra.mxu0 %v330
      %384 = vmatpush.msra.mxu0 %v326
      %385 = vmatpush.msra.mxu0 %v322
      %386 = vmatpush.msra.mxu0 %v318
      %387 = vmatpush.msra.mxu0 %v314
      %388 = vmatpush.msra.mxu0 %v310
      %389 = vmatpush.msra.mxu0 %v306
      %390 = vmatpush.msra.mxu0 %v302
      %391 = vmatpush.msra.mxu0 %v298
      %392 = vmatpush.msra.mxu0 %v294
      %393 = vmatpush.msra.mxu0 %v290
      %394 = vmatpush.msra.mxu0 %v286
      %395 = vmatpush.msra.mxu0 %v282
      %396 = vmatmul.f32.gmra.mxu0 %v345
      %v397 = vpop.f32.mrf.mxu0
      %v398 = vadd.f32 %v341, %v397
      %399 = vdwg.mxu0
      %400 = vmatpush.msra.mxu0 0.0
      %401 = vmatpush.msra.mxu0 0.0
      %402 = vmatpush.msra.mxu0 %v355
      %403 = vmatpush.msra.mxu0 %v331
      %404 = vmatpush.msra.mxu0 %v327
      %405 = vmatpush.msra.mxu0 %v323
      %406 = vmatpush.msra.mxu0 %v319
      %407 = vmatpush.msra.mxu0 %v315
      %408 = vmatpush.msra.mxu0 %v311
      %409 = vmatpush.msra.mxu0 %v307
      %410 = vmatpush.msra.mxu0 %v303
      %411 = vmatpush.msra.mxu0 %v299
      %412 = vmatpush.msra.mxu0 %v295
      %413 = vmatpush.msra.mxu0 %v291
      %414 = vmatpush.msra.mxu0 %v287
      %415 = vmatpush.msra.mxu0 %v283
      %416 = vmatmul.f32.gmra.mxu0 %v345
      %v417 = vpop.f32.mrf.mxu0
      %v418 = vadd.f32 %v341, %v417
      %419 = vdwg.mxu0
      %420 = vmatpush.msra.mxu0 0.0
      %421 = vmatpush.msra.mxu0 0.0
      %422 = vmatpush.msra.mxu0 %v358
      %423 = vmatpush.msra.mxu0 %v332
      %424 = vmatpush.msra.mxu0 %v328
      %425 = vmatpush.msra.mxu0 %v324
      %426 = vmatpush.msra.mxu0 %v320
      %427 = vmatpush.msra.mxu0 %v316
      %428 = vmatpush.msra.mxu0 %v312
      %429 = vmatpush.msra.mxu0 %v308
      %430 = vmatpush.msra.mxu0 %v304
      %431 = vmatpush.msra.mxu0 %v300
      %432 = vmatpush.msra.mxu0 %v296
      %433 = vmatpush.msra.mxu0 %v292
      %434 = vmatpush.msra.mxu0 %v288
      %435 = vmatpush.msra.mxu0 %v284
      %436 = vmatmul.f32.gmra.mxu0 %v345
      %v437 = vpop.f32.mrf.mxu0
      %v438 = vadd.f32 %v341, %v437
      %439 = vdwg.mxu0
      %440 = vst [vmem:[%s271] sm:$0xff] %v378
      %441 = vst [vmem:[%s271 + $0x8] sm:$0xff] %v398
      %442 = vst [vmem:[%s271 + $0x10] sm:$0xff] %v418
      %443 = vst [vmem:[%s271 + $0x18] sm:$0xff] %v438
      %v444 = vadd.f32 %v378, %v398
      %v445 = vadd.f32 %v444, %v418
      %v446 = vadd.f32 %v445, %v438
      %447 = vadd.xlane.f32.xlu0 %v446
      %v448 = vpop.xlane.xlu0 %447
      %vm449 = vcmask 7168
      %450 = vst.msk [vmem:[%s275] sm:$0xff] %vm449, %v448
      %v451 = vmul.f32 %v378, %v378
      %v452 = vmul.f32 %v398, %v398
      %v453 = vmul.f32 %v418, %v418
      %v454 = vmul.f32 %v438, %v438
      %v455 = vadd.f32 %v451, %v452
      %v456 = vadd.f32 %v455, %v453
      %v457 = vadd.f32 %v456, %v454
      %458 = vadd.xlane.f32.xlu0 %v457
      %v459 = vpop.xlane.xlu0 %458
      %460 = vst.msk [vmem:[%s279] sm:$0xff] %vm449, %v459
      %p461 = scmp.lt.s32.totalorder %s17, 1
      %s462 = scalar_select %p461, %s17, 1
      %s463 = smul.addr %s462, 4
      %s464 = smul.addr %s463, 8
      %s465 = scalar_lea.vmem %s3, %s464
      %p466 = scmp.lt.s32.totalorder %s17, 1
      %s467 = scalar_select %p466, %s17, 1
      %s468 = smul.addr %s467, 8
      %s469 = scalar_lea.vmem %s4, %s468
      %p470 = scmp.lt.s32.totalorder %s17, 1
      %s471 = scalar_select %p470, %s17, 1
      %s472 = smul.addr %s471, 8
      %s473 = scalar_lea.vmem %s5, %s472
      // Predicated region
      $region33: #{single_conv_up_forward.2} parent=31 // pred_check
        %p474 = pneg %p113
      $region34: #{single_conv_up_forward.2} parent=31 // pred_check_branch
        %476 = sbr.rel (%p474) target = $region36
      $region35: #{single_conv_up_forward.2} parent=31 // pred_region
        _
      $region36: #{single_conv_up_forward.2} parent=31 // pred_fallthru
        _
      // Predicated region
      $region37: #{single_conv_up_forward.2} parent=31 // pred_check
        %p477 = pneg %p139
      $region38: #{single_conv_up_forward.2} parent=31 // pred_check_branch
        %479 = sbr.rel (%p477) target = $region40
      $region39: #{single_conv_up_forward.2} parent=31 // pred_region
        _
      $region40: #{single_conv_up_forward.2} parent=31 // pred_fallthru
        _
      // Predicated region
      $region41: #{single_conv_up_forward.2} parent=31 // pred_check
        %p480 = pneg %p165
      $region42: #{single_conv_up_forward.2} parent=31 // pred_check_branch
        %482 = sbr.rel (%p480) target = $region44
      $region43: #{single_conv_up_forward.2} parent=31 // pred_region
        _
      $region44: #{single_conv_up_forward.2} parent=31 // pred_fallthru
        _
    $region32: #{single_conv_up_forward.2} parent=5 // pred_fallthru
      _
    %p483 = scmp.le.s32.totalorder 2, %s12
    // Predicated region
    $region45: #{single_conv_up_forward.2} parent=5 // pred_check
      %p484 = pneg %p483
    $region46: #{single_conv_up_forward.2} parent=5 // pred_check_branch
      %486 = sbr.rel (%p484) target = $region48
    $region47: #{single_conv_up_forward.2} parent=5 // pred_region
      %s487 = ssub.s32 %s12, 2
      // Predicated region
      $region49: #{single_conv_up_forward.2} parent=47 // pred_check
        %p488 = pneg %p119
      $region50: #{single_conv_up_forward.2} parent=47 // pred_check_branch
        %490 = sbr.rel (%p488) target = $region52
      $region51: #{single_conv_up_forward.2} parent=47 // pred_region
        %p491 = scmp.lt.s32.totalorder %s18, 1
        %s492 = scalar_select %p491, %s18, 1
        %s493 = smul.addr %s492, 4
        %s494 = smul.addr %s493, 8
        %s495 = scalar_lea.vmem %s3, %s494
      $region52: #{single_conv_up_forward.2} parent=47 // pred_fallthru
        _
      // Predicated region
      $region53: #{single_conv_up_forward.2} parent=47 // pred_check
        %p496 = pneg %p145
      $region54: #{single_conv_up_forward.2} parent=47 // pred_check_branch
        %498 = sbr.rel (%p496) target = $region56
      $region55: #{single_conv_up_forward.2} parent=47 // pred_region
        %p499 = scmp.lt.s32.totalorder %s18, 1
        %s500 = scalar_select %p499, %s18, 1
        %s501 = smul.addr %s500, 8
        %s502 = scalar_lea.vmem %s4, %s501
      $region56: #{single_conv_up_forward.2} parent=47 // pred_fallthru
        _
      // Predicated region
      $region57: #{single_conv_up_forward.2} parent=47 // pred_check
        %p503 = pneg %p171
      $region58: #{single_conv_up_forward.2} parent=47 // pred_check_branch
        %505 = sbr.rel (%p503) target = $region60
      $region59: #{single_conv_up_forward.2} parent=47 // pred_region
        %p506 = scmp.lt.s32.totalorder %s18, 1
        %s507 = scalar_select %p506, %s18, 1
        %s508 = smul.addr %s507, 8
        %s509 = scalar_lea.vmem %s5, %s508
      $region60: #{single_conv_up_forward.2} parent=47 // pred_fallthru
        _
    $region48: #{single_conv_up_forward.2} parent=5 // pred_fallthru
      _
  $region6: #{single_conv_up_forward.2} parent=0 // loop_footer
    %s16 = sadd.s32 1, %s12
  $region7: #{single_conv_up_forward.2} parent=0 // loop_footer_branch
    %11 = sbr.rel target = $region3
  $region8: #{single_conv_up_forward.2} parent=0 // loop_exit
    _

// kernel: single_conv_up_forward.3
$region0: #{single_conv_up_forward.3}
  #allocation0 [shape = 'u32[]', space=smem, size = 0x4, offset = 0x4, fixed_abs, tag = 'smem constant byte address 0x4 - core index']
  #allocation1 [shape = 'u32[72,128]{1,0:T(1,128)}', space=vmem, size = 0x9000, scoped, tag = 'internal scratch']
  %s0 = inlined_call_operand.vmem [shape: f32[2,64,64], index: 0, kind: input, shape index: {}]
  %s1 = inlined_call_operand.vmem [shape: f32[64,64], index: 1, kind: input, shape index: {}]
  %s2 = inlined_call_operand.vmem [shape: f32[64,64], index: 2, kind: input, shape index: {}]
  %s3 = inlined_call_operand.vmem [shape: f32[64,256], index: 3, kind: input, shape index: {}]
  %s4 = inlined_call_operand.vmem [shape: f32[2,8,16,256], index: 4, kind: output, shape index: {}]
  %s5 = sld [smem:[#allocation0]]
  $region49: #{single_conv_up_forward.3} parent=0
    _
  %s7 = ssub.s32 1, %s5
  %s8 = scalar_select 0, %s7, %s5
  loop: start=0, step=1, limit=4
  $region2: #{single_conv_up_forward.3} parent=0 // loop_pre_header
    _
  $region3: #{single_conv_up_forward.3} parent=0 // loop_header
    %s10 = sphi 0, %s14
    %p11 = scmp.ge.s32.totalorder %s10, 4
    %s20 = sphi 0, %s22
    %s23 = sphi 0, %s20
    %s24 = sphi 0, %s23
    %s40 = sphi 0, %s24
    %s44 = sphi 0, %s44
    %s46 = sphi 0, %s44
    %s47 = sphi 0, %s46
    %s61 = sphi 0, %s47
    %s65 = sphi 0, %s65
    %s67 = sphi 0, %s65
    %s68 = sphi 0, %s67
    %s82 = sphi 0, %s68
    %s86 = sphi 0, %s86
    %s88 = sphi 0, %s86
    %s89 = sphi 0, %s88
    %s103 = sphi 0, %s89
    %s109 = sphi 0, %s111
    %s112 = sphi 0, %s109
    %s113 = sphi 0, %s112
    %s129 = sphi 0, %s113
  $region4: #{single_conv_up_forward.3} parent=0 // loop_header_branch
    %13 = sbr.rel (%p11) target = $region8
  $region5: #{single_conv_up_forward.3} parent=0 // loop_body
    %s15 = ssub.s32 %s10, 1
    %s16 = ssub.s32 %s10, 2
    %s17 = sadd.s32 %s10, 1
    %s18 = ssub.s32 %s10, %s17
    %p19 = scmp.eq.s32.totalorder %s18, 0
    %s21 = sadd.s32 %s20, 1
    %s22 = scalar_select %p19, %s20, %s21
    %p25 = pneg %p19
    %p26 = scmp.eq.s32.totalorder %s10, 1
    %p27 = por %p25, %p26
    %p28 = scmp.ne.s32.totalorder %s20, %s23
    %p29 = scmp.eq.s32.totalorder %s10, 0
    %p30 = por %p28, %p29
    %p31 = scmp.ne.s32.totalorder %s20, %s23
    %p32 = scmp.eq.s32.totalorder %s15, 1
    %p33 = por %p31, %p32
    %p34 = scmp.ne.s32.totalorder %s23, %s24
    %p35 = scmp.eq.s32.totalorder %s15, 0
    %p36 = por %p34, %p35
    %p37 = scmp.ne.s32.totalorder %s23, %s24
    %p38 = scmp.eq.s32.totalorder %s16, 1
    %p39 = por %p37, %p38
    %p41 = scmp.ne.s32.totalorder %s24, %s40
    %p42 = scmp.eq.s32.totalorder %s16, 0
    %p43 = por %p41, %p42
    %s45 = sadd.s32 %s44, 1
    %p48 = scmp.eq.s32.totalorder %s10, 1
    %p49 = scmp.ne.s32.totalorder %s44, %s46
    %p50 = scmp.eq.s32.totalorder %s10, 0
    %p51 = por %p49, %p50
    %p52 = scmp.ne.s32.totalorder %s44, %s46
    %p53 = scmp.eq.s32.totalorder %s15, 1
    %p54 = por %p52, %p53
    %p55 = scmp.ne.s32.totalorder %s46, %s47
    %p56 = scmp.eq.s32.totalorder %s15, 0
    %p57 = por %p55, %p56
    %p58 = scmp.ne.s32.totalorder %s46, %s47
    %p59 = scmp.eq.s32.totalorder %s16, 1
    %p60 = por %p58, %p59
    %p62 = scmp.ne.s32.totalorder %s47, %s61
    %p63 = scmp.eq.s32.totalorder %s16, 0
    %p64 = por %p62, %p63
    %s66 = sadd.s32 %s65, 1
    %p69 = scmp.eq.s32.totalorder %s10, 1
    %p70 = scmp.ne.s32.totalorder %s65, %s67
    %p71 = scmp.eq.s32.totalorder %s10, 0
    %p72 = por %p70, %p71
    %p73 = scmp.ne.s32.totalorder %s65, %s67
    %p74 = scmp.eq.s32.totalorder %s15, 1
    %p75 = por %p73, %p74
    %p76 = scmp.ne.s32.totalorder %s67, %s68
    %p77 = scmp.eq.s32.totalorder %s15, 0
    %p78 = por %p76, %p77
    %p79 = scmp.ne.s32.totalorder %s67, %s68
    %p80 = scmp.eq.s32.totalorder %s16, 1
    %p81 = por %p79, %p80
    %p83 = scmp.ne.s32.totalorder %s68, %s82
    %p84 = scmp.eq.s32.totalorder %s16, 0
    %p85 = por %p83, %p84
    %s87 = sadd.s32 %s86, 1
    %p90 = scmp.eq.s32.totalorder %s10, 1
    %p91 = scmp.ne.s32.totalorder %s86, %s88
    %p92 = scmp.eq.s32.totalorder %s10, 0
    %p93 = por %p91, %p92
    %p94 = scmp.ne.s32.totalorder %s86, %s88
    %p95 = scmp.eq.s32.totalorder %s15, 1
    %p96 = por %p94, %p95
    %p97 = scmp.ne.s32.totalorder %s88, %s89
    %p98 = scmp.eq.s32.totalorder %s15, 0
    %p99 = por %p97, %p98
    %p100 = scmp.ne.s32.totalorder %s88, %s89
    %p101 = scmp.eq.s32.totalorder %s16, 1
    %p102 = por %p100, %p101
    %p104 = scmp.ne.s32.totalorder %s89, %s103
    %p105 = scmp.eq.s32.totalorder %s16, 0
    %p106 = por %p104, %p105
    %s107 = ssub.s32 %s10, %s17
    %p108 = scmp.eq.s32.totalorder %s107, 0
    %s110 = sadd.s32 %s109, 1
    %s111 = scalar_select %p108, %s109, %s110
    %p114 = pneg %p108
    %p115 = scmp.eq.s32.totalorder %s10, 1
    %p116 = por %p114, %p115
    %p117 = scmp.ne.s32.totalorder %s109, %s112
    %p118 = scmp.eq.s32.totalorder %s10, 0
    %p119 = por %p117, %p118
    %p120 = scmp.ne.s32.totalorder %s109, %s112
    %p121 = scmp.eq.s32.totalorder %s15, 1
    %p122 = por %p120, %p121
    %p123 = scmp.ne.s32.totalorder %s112, %s113
    %p124 = scmp.eq.s32.totalorder %s15, 0
    %p125 = por %p123, %p124
    %p126 = scmp.ne.s32.totalorder %s112, %s113
    %p127 = scmp.eq.s32.totalorder %s16, 1
    %p128 = por %p126, %p127
    %p130 = scmp.ne.s32.totalorder %s113, %s129
    %p131 = scmp.eq.s32.totalorder %s16, 0
    %p132 = por %p130, %p131
    %p133 = scmp.le.s32.totalorder 1, %s10
    %p134 = scmp.lt.s32.totalorder %s10, 3
    %p135 = pnand %p133, %p134
    %p136 = pneg %p135
    // Predicated region
    $region9: #{single_conv_up_forward.3} parent=5 // pred_check
      _
    $region10: #{single_conv_up_forward.3} parent=5 // pred_check_branch
      %138 = sbr.rel (%p135) target = $region12
    $region11: #{single_conv_up_forward.3} parent=5 // pred_region
      %s139 = ssub.s32 %s10, 1
      // Predicated region
      $region13: #{single_conv_up_forward.3} parent=11 // pred_check
        %p140 = pneg %p57
      $region14: #{single_conv_up_forward.3} parent=11 // pred_check_branch
        %142 = sbr.rel (%p140) target = $region16
      $region15: #{single_conv_up_forward.3} parent=11 // pred_region
        _
      $region16: #{single_conv_up_forward.3} parent=11 // pred_fallthru
        _
      // Predicated region
      $region17: #{single_conv_up_forward.3} parent=11 // pred_check
        %p143 = pneg %p78
      $region18: #{single_conv_up_forward.3} parent=11 // pred_check_branch
        %145 = sbr.rel (%p143) target = $region20
      $region19: #{single_conv_up_forward.3} parent=11 // pred_region
        _
      $region20: #{single_conv_up_forward.3} parent=11 // pred_fallthru
        _
      // Predicated region
      $region21: #{single_conv_up_forward.3} parent=11 // pred_check
        %p146 = pneg %p99
      $region22: #{single_conv_up_forward.3} parent=11 // pred_check_branch
        %148 = sbr.rel (%p146) target = $region24
      $region23: #{single_conv_up_forward.3} parent=11 // pred_region
        _
      $region24: #{single_conv_up_forward.3} parent=11 // pred_fallthru
        _
    $region12: #{single_conv_up_forward.3} parent=5 // pred_fallthru
      _
    %p149 = scmp.lt.s32.totalorder %s10, 2
    // Predicated region
    $region25: #{single_conv_up_forward.3} parent=5 // pred_check
      %p150 = pneg %p149
    $region26: #{single_conv_up_forward.3} parent=5 // pred_check_branch
      %152 = sbr.rel (%p150) target = $region28
    $region27: #{single_conv_up_forward.3} parent=5 // pred_region
      // Predicated region
      $region29: #{single_conv_up_forward.3} parent=27 // pred_check
        %p153 = pneg %p30
      $region30: #{single_conv_up_forward.3} parent=27 // pred_check_branch
        %155 = sbr.rel (%p153) target = $region32
      $region31: #{single_conv_up_forward.3} parent=27 // pred_region
        %p156 = scmp.lt.s32.totalorder %s10, 1
        %s157 = scalar_select %p156, %s10, 1
        %s158 = smul.addr %s157, 8
        %s159 = smul.addr %s158, 8
        %s160 = scalar_lea.vmem %s0, %s159
      $region32: #{single_conv_up_forward.3} parent=27 // pred_fallthru
        _
    $region28: #{single_conv_up_forward.3} parent=5 // pred_fallthru
      _
    %p161 = scmp.le.s32.totalorder 1, %s10
    %p162 = scmp.lt.s32.totalorder %s10, 3
    %p163 = pnand %p161, %p162
    %p164 = pneg %p163
    // Predicated region
    $region33: #{single_conv_up_forward.3} parent=5 // pred_check
      _
    $region34: #{single_conv_up_forward.3} parent=5 // pred_check_branch
      %166 = sbr.rel (%p163) target = $region36
    $region35: #{single_conv_up_forward.3} parent=5 // pred_region
      %s167 = ssub.s32 %s10, 1
      %p168 = scmp.lt.s32.totalorder %s15, 1
      %s169 = scalar_select %p168, %s15, 1
      %s170 = smul.addr %s169, 8
      %s171 = smul.addr %s170, 8
      %s172 = scalar_lea.vmem %s0, %s171
      %p173 = pneg %p36
      %p174 = pneg %p33
      %p175 = pneg %p57
      %p176 = pneg %p54
      %p177 = pneg %p78
      %p178 = pneg %p75
      %p179 = pneg %p99
      %p180 = pneg %p96
      %p181 = pneg %p125
      %p182 = pneg %p122
      %p183 = scmp.lt.s32.totalorder %s15, 1
      %s184 = scalar_select %p183, %s15, 1
      %s185 = smul.addr %s184, 32
      %s186 = smul.addr %s185, 8
      %s187 = scalar_lea.vmem %s4, %s186
      %p188 = scmp.lt.s32.totalorder %s15, 1
      %s189 = scalar_select %p188, %s15, 1
      %s190 = smul.addr %s189, 8
      %s191 = smul.addr %s190, 8
      %s192 = scalar_lea.vmem %s0, %s191
      %p193 = scmp.lt.s32.totalorder %s15, 1
      %s194 = scalar_select %p193, %s15, 1
      %s195 = smul.addr %s194, 32
      %s196 = smul.addr %s195, 8
      %s197 = scalar_lea.vmem %s4, %s196
      %v198 = vld [vmem:[%s192] sm:$0xff]
      %v199 = vld [vmem:[%s192 + $0x8] sm:$0xff]
      %v200 = vld [vmem:[%s192 + $0x10] sm:$0xff]
      %v201 = vld [vmem:[%s192 + $0x18] sm:$0xff]
      %v202 = vld [vmem:[%s192 + $0x20] sm:$0xff]
      %v203 = vld [vmem:[%s192 + $0x28] sm:$0xff]
      %v204 = vld [vmem:[%s192 + $0x30] sm:$0xff]
      %v205 = vld [vmem:[%s192 + $0x38] sm:$0xff]
      %v206 = vld [vmem:[%s1] sm:$0xff]
      %v207 = vld [vmem:[%s1 + $0x8] sm:$0xff]
      %v208 = vld [vmem:[%s1 + $0x10] sm:$0xff]
      %v209 = vld [vmem:[%s1 + $0x18] sm:$0xff]
      %v210 = vld [vmem:[%s1 + $0x20] sm:$0xff]
      %v211 = vld [vmem:[%s1 + $0x28] sm:$0xff]
      %v212 = vld [vmem:[%s1 + $0x30] sm:$0xff]
      %v213 = vld [vmem:[%s1 + $0x38] sm:$0xff]
      %v214 = vmul.f32 %v198, %v206
      %v215 = vmul.f32 %v199, %v207
      %v216 = vmul.f32 %v200, %v208
      %v217 = vmul.f32 %v201, %v209
      %v218 = vmul.f32 %v202, %v210
      %v219 = vmul.f32 %v203, %v211
      %v220 = vmul.f32 %v204, %v212
      %v221 = vmul.f32 %v205, %v213
      %v222 = vld [vmem:[%s2] sm:$0xff]
      %v223 = vld [vmem:[%s2 + $0x8] sm:$0xff]
      %v224 = vld [vmem:[%s2 + $0x10] sm:$0xff]
      %v225 = vld [vmem:[%s2 + $0x18] sm:$0xff]
      %v226 = vld [vmem:[%s2 + $0x20] sm:$0xff]
      %v227 = vld [vmem:[%s2 + $0x28] sm:$0xff]
      %v228 = vld [vmem:[%s2 + $0x30] sm:$0xff]
      %v229 = vld [vmem:[%s2 + $0x38] sm:$0xff]
      %v230 = vadd.f32 %v214, %v222
      %v231 = vadd.f32 %v215, %v223
      %v232 = vadd.f32 %v216, %v224
      %v233 = vadd.f32 %v217, %v225
      %v234 = vadd.f32 %v218, %v226
      %v235 = vadd.f32 %v219, %v227
      %v236 = vadd.f32 %v220, %v228
      %v237 = vadd.f32 %v221, %v229
      %vm238 = vcmp.ge.f32.partialorder %v230, 0.0
      %vm239 = vcmp.ge.f32.partialorder %v231, 0.0
      %vm240 = vcmp.ge.f32.partialorder %v232, 0.0
      %vm241 = vcmp.ge.f32.partialorder %v233, 0.0
      %vm242 = vcmp.ge.f32.partialorder %v234, 0.0
      %vm243 = vcmp.ge.f32.partialorder %v235, 0.0
      %vm244 = vcmp.ge.f32.partialorder %v236, 0.0
      %vm245 = vcmp.ge.f32.partialorder %v237, 0.0
      %v246 = vmul.f32 %v230, 0.1
      %v247 = vmul.f32 %v231, 0.1
      %v248 = vmul.f32 %v232, 0.1
      %v249 = vmul.f32 %v233, 0.1
      %v250 = vmul.f32 %v234, 0.1
      %v251 = vmul.f32 %v235, 0.1
      %v252 = vmul.f32 %v236, 0.1
      %v253 = vmul.f32 %v237, 0.1
      %v254 = vsel %vm238, %v230, %v246
      %v255 = vsel %vm239, %v231, %v247
      %v256 = vsel %vm240, %v232, %v248
      %v257 = vsel %vm241, %v233, %v249
      %v258 = vsel %vm242, %v234, %v250
      %v259 = vsel %vm243, %v235, %v251
      %v260 = vsel %vm244, %v236, %v252
      %v261 = vsel %vm245, %v237, %v253
      %v262 = vld [vmem:[%s3] sm:$0xff]
      %v263 = vld [vmem:[%s3 + $0x8] sm:$0xff]
      %v264 = vld [vmem:[%s3 + $0x10] sm:$0xff]
      %v265 = vld [vmem:[%s3 + $0x18] sm:$0xff]
      %v266 = vld [vmem:[%s3 + $0x20] sm:$0xff]
      %v267 = vld [vmem:[%s3 + $0x28] sm:$0xff]
      %v268 = vld [vmem:[%s3 + $0x30] sm:$0xff]
      %v269 = vld [vmem:[%s3 + $0x38] sm:$0xff]
      %v270 = vld [vmem:[%s3 + $0x40] sm:$0xff]
      %v271 = vld [vmem:[%s3 + $0x48] sm:$0xff]
      %v272 = vld [vmem:[%s3 + $0x50] sm:$0xff]
      %v273 = vld [vmem:[%s3 + $0x58] sm:$0xff]
      %v274 = vld [vmem:[%s3 + $0x60] sm:$0xff]
      %v275 = vld [vmem:[%s3 + $0x68] sm:$0xff]
      %v276 = vld [vmem:[%s3 + $0x70] sm:$0xff]
      %v277 = vld [vmem:[%s3 + $0x78] sm:$0xff]
      %vm278 = vcmask 523264
      %v280 = vsel %vm278, %v254, 0
      %v283 = vsel %vm278, %v255, 0
      %v286 = vsel %vm278, %v256, 0
      %v289 = vsel %vm278, %v257, 0
      %v292 = vsel %vm278, %v258, 0
      %v295 = vsel %vm278, %v259, 0
      %v298 = vsel %vm278, %v260, 0
      %v301 = vsel %vm278, %v261, 0
      %303 = vmatpush.msra.mxu0 0.0
      %304 = vmatpush.msra.mxu0 0.0
      %305 = vmatpush.msra.mxu0 0.0
      %306 = vmatpush.msra.mxu0 0.0
      %307 = vmatpush.msra.mxu0 0.0
      %308 = vmatpush.msra.mxu0 0.0
      %309 = vmatpush.msra.mxu0 0.0
      %310 = vmatpush.msra.mxu0 0.0
      %311 = vmatpush.msra.mxu0 %v276
      %312 = vmatpush.msra.mxu0 %v274
      %313 = vmatpush.msra.mxu0 %v272
      %314 = vmatpush.msra.mxu0 %v270
      %315 = vmatpush.msra.mxu0 %v268
      %316 = vmatpush.msra.mxu0 %v266
      %317 = vmatpush.msra.mxu0 %v264
      %318 = vmatpush.msra.mxu0 %v262
      %319 = vmatmul.f32.gmra.mxu0 %v280
      %v320 = vpop.f32.mrf.mxu0
      %v321 = vadd.f32 0.0, %v320
      %322 = vmatmul.f32.gmra.mxu0 %v283
      %v323 = vpop.f32.mrf.mxu0
      %v324 = vadd.f32 0.0, %v323
      %325 = vmatmul.f32.gmra.mxu0 %v286
      %v326 = vpop.f32.mrf.mxu0
      %v327 = vadd.f32 0.0, %v326
      %328 = vmatmul.f32.gmra.mxu0 %v289
      %v329 = vpop.f32.mrf.mxu0
      %v330 = vadd.f32 0.0, %v329
      %331 = vmatmul.f32.gmra.mxu0 %v292
      %v332 = vpop.f32.mrf.mxu0
      %v333 = vadd.f32 0.0, %v332
      %334 = vmatmul.f32.gmra.mxu0 %v295
      %v335 = vpop.f32.mrf.mxu0
      %v336 = vadd.f32 0.0, %v335
      %337 = vmatmul.f32.gmra.mxu0 %v298
      %v338 = vpop.f32.mrf.mxu0
      %v339 = vadd.f32 0.0, %v338
      %340 = vmatmul.f32.gmra.mxu0 %v301
      %v341 = vpop.f32.mrf.mxu0
      %v342 = vadd.f32 0.0, %v341
      %343 = vdwg.mxu0
      %344 = vmatpush.msra.mxu0 0.0
      %345 = vmatpush.msra.mxu0 0.0
      %346 = vmatpush.msra.mxu0 0.0
      %347 = vmatpush.msra.mxu0 0.0
      %348 = vmatpush.msra.mxu0 0.0
      %349 = vmatpush.msra.mxu0 0.0
      %350 = vmatpush.msra.mxu0 0.0
      %351 = vmatpush.msra.mxu0 0.0
      %352 = vmatpush.msra.mxu0 %v277
      %353 = vmatpush.msra.mxu0 %v275
      %354 = vmatpush.msra.mxu0 %v273
      %355 = vmatpush.msra.mxu0 %v271
      %356 = vmatpush.msra.mxu0 %v269
      %357 = vmatpush.msra.mxu0 %v267
      %358 = vmatpush.msra.mxu0 %v265
      %359 = vmatpush.msra.mxu0 %v263
      %360 = vmatmul.f32.gmra.mxu0 %v280
      %v361 = vpop.f32.mrf.mxu0
      %v362 = vadd.f32 0.0, %v361
      %363 = vmatmul.f32.gmra.mxu0 %v283
      %v364 = vpop.f32.mrf.mxu0
      %v365 = vadd.f32 0.0, %v364
      %366 = vmatmul.f32.gmra.mxu0 %v286
      %v367 = vpop.f32.mrf.mxu0
      %v368 = vadd.f32 0.0, %v367
      %369 = vmatmul.f32.gmra.mxu0 %v289
      %v370 = vpop.f32.mrf.mxu0
      %v371 = vadd.f32 0.0, %v370
      %372 = vmatmul.f32.gmra.mxu0 %v292
      %v373 = vpop.f32.mrf.mxu0
      %v374 = vadd.f32 0.0, %v373
      %375 = vmatmul.f32.gmra.mxu0 %v295
      %v376 = vpop.f32.mrf.mxu0
      %v377 = vadd.f32 0.0, %v376
      %378 = vmatmul.f32.gmra.mxu0 %v298
      %v379 = vpop.f32.mrf.mxu0
      %v380 = vadd.f32 0.0, %v379
      %381 = vmatmul.f32.gmra.mxu0 %v301
      %v382 = vpop.f32.mrf.mxu0
      %v383 = vadd.f32 0.0, %v382
      %384 = vdwg.mxu0
      %v401 = vrot.slane %v362, 7
      %v402 = vrot.slane %v365, 7
      %v403 = vrot.slane %v368, 7
      %v404 = vrot.slane %v371, 7
      %v405 = vrot.slane %v374, 7
      %v406 = vrot.slane %v377, 7
      %v407 = vrot.slane %v380, 7
      %v408 = vrot.slane %v383, 7
      %vm409 = vcmask 1040384
      %v410 = vsel %vm409, %v321, %v401
      %vm411 = vcmask 1041409
      %v412 = vsel %vm411, %v321, %v401
      %v413 = vrot.slane %v412, 1
      %vm414 = vcmask 1042434
      %v415 = vsel %vm414, %v321, %v401
      %v416 = vrot.slane %v415, 2
      %vm417 = vcmask 1043459
      %v418 = vsel %vm417, %v321, %v401
      %v419 = vrot.slane %v418, 3
      %vm420 = vcmask 1044484
      %v421 = vsel %vm420, %v321, %v401
      %v422 = vrot.slane %v421, 4
      %vm423 = vcmask 1045509
      %v424 = vsel %vm423, %v321, %v401
      %v425 = vrot.slane %v424, 5
      %vm426 = vcmask 1046534
      %v427 = vsel %vm426, %v321, %v401
      %v428 = vrot.slane %v427, 6
      %vm429 = vcmask 1046528
      %v430 = vsel %vm429, %v401, %v321
      %v431 = vrot.slane %v430, 7
      %v432 = vsel %vm409, %v324, %v402
      %v433 = vsel %vm411, %v324, %v402
      %v434 = vrot.slane %v433, 1
      %v435 = vsel %vm414, %v324, %v402
      %v436 = vrot.slane %v435, 2
      %v437 = vsel %vm417, %v324, %v402
      %v438 = vrot.slane %v437, 3
      %v439 = vsel %vm420, %v324, %v402
      %v440 = vrot.slane %v439, 4
      %v441 = vsel %vm423, %v324, %v402
      %v442 = vrot.slane %v441, 5
      %v443 = vsel %vm426, %v324, %v402
      %v444 = vrot.slane %v443, 6
      %v445 = vsel %vm429, %v402, %v324
      %v446 = vrot.slane %v445, 7
      %v447 = vsel %vm409, %v327, %v403
      %v448 = vsel %vm411, %v327, %v403
      %v449 = vrot.slane %v448, 1
      %v450 = vsel %vm414, %v327, %v403
      %v451 = vrot.slane %v450, 2
      %v452 = vsel %vm417, %v327, %v403
      %v453 = vrot.slane %v452, 3
      %v454 = vsel %vm420, %v327, %v403
      %v455 = vrot.slane %v454, 4
      %v456 = vsel %vm423, %v327, %v403
      %v457 = vrot.slane %v456, 5
      %v458 = vsel %vm426, %v327, %v403
      %v459 = vrot.slane %v458, 6
      %v460 = vsel %vm429, %v403, %v327
      %v461 = vrot.slane %v460, 7
      %v462 = vsel %vm409, %v330, %v404
      %v463 = vsel %vm411, %v330, %v404
      %v464 = vrot.slane %v463, 1
      %v465 = vsel %vm414, %v330, %v404
      %v466 = vrot.slane %v465, 2
      %v467 = vsel %vm417, %v330, %v404
      %v468 = vrot.slane %v467, 3
      %v469 = vsel %vm420, %v330, %v404
      %v470 = vrot.slane %v469, 4
      %v471 = vsel %vm423, %v330, %v404
      %v472 = vrot.slane %v471, 5
      %v473 = vsel %vm426, %v330, %v404
      %v474 = vrot.slane %v473, 6
      %v475 = vsel %vm429, %v404, %v330
      %v476 = vrot.slane %v475, 7
      %v477 = vsel %vm409, %v333, %v405
      %v478 = vsel %vm411, %v333, %v405
      %v479 = vrot.slane %v478, 1
      %v480 = vsel %vm414, %v333, %v405
      %v481 = vrot.slane %v480, 2
      %v482 = vsel %vm417, %v333, %v405
      %v483 = vrot.slane %v482, 3
      %v484 = vsel %vm420, %v333, %v405
      %v485 = vrot.slane %v484, 4
      %v486 = vsel %vm423, %v333, %v405
      %v487 = vrot.slane %v486, 5
      %v488 = vsel %vm426, %v333, %v405
      %v489 = vrot.slane %v488, 6
      %v490 = vsel %vm429, %v405, %v333
      %v491 = vrot.slane %v490, 7
      %v492 = vsel %vm409, %v336, %v406
      %v493 = vsel %vm411, %v336, %v406
      %v494 = vrot.slane %v493, 1
      %v495 = vsel %vm414, %v336, %v406
      %v496 = vrot.slane %v495, 2
      %v497 = vsel %vm417, %v336, %v406
      %v498 = vrot.slane %v497, 3
      %v499 = vsel %vm420, %v336, %v406
      %v500 = vrot.slane %v499, 4
      %v501 = vsel %vm423, %v336, %v406
      %v502 = vrot.slane %v501, 5
      %v503 = vsel %vm426, %v336, %v406
      %v504 = vrot.slane %v503, 6
      %v505 = vsel %vm429, %v406, %v336
      %v506 = vrot.slane %v505, 7
      %v507 = vsel %vm409, %v339, %v407
      %v508 = vsel %vm411, %v339, %v407
      %v509 = vrot.slane %v508, 1
      %v510 = vsel %vm414, %v339, %v407
      %v511 = vrot.slane %v510, 2
      %v512 = vsel %vm417, %v339, %v407
      %v513 = vrot.slane %v512, 3
      %v514 = vsel %vm420, %v339, %v407
      %v515 = vrot.slane %v514, 4
      %v516 = vsel %vm423, %v339, %v407
      %v517 = vrot.slane %v516, 5
      %v518 = vsel %vm426, %v339, %v407
      %v519 = vrot.slane %v518, 6
      %v520 = vsel %vm429, %v407, %v339
      %v521 = vrot.slane %v520, 7
      %v522 = vsel %vm409, %v342, %v408
      %v523 = vsel %vm411, %v342, %v408
      %v524 = vrot.slane %v523, 1
      %v525 = vsel %vm414, %v342, %v408
      %v526 = vrot.slane %v525, 2
      %v527 = vsel %vm417, %v342, %v408
      %v528 = vrot.slane %v527, 3
      %v529 = vsel %vm420, %v342, %v408
      %v530 = vrot.slane %v529, 4
      %v531 = vsel %vm423, %v342, %v408
      %v532 = vrot.slane %v531, 5
      %v533 = vsel %vm426, %v342, %v408
      %v534 = vrot.slane %v533, 6
      %v535 = vsel %vm429, %v408, %v342
      %v536 = vrot.slane %v535, 7
      %v537 = vperm.slane %v410, 0
      %v538 = vperm.slane %v410, 1
      %v539 = vperm.slane %v413, 0
      %v540 = vperm.slane %v413, 1
      %v541 = vperm.slane %v416, 0
      %v542 = vperm.slane %v416, 1
      %v543 = vperm.slane %v419, 0
      %v544 = vperm.slane %v419, 1
      %v545 = vperm.slane %v422, 0
      %v546 = vperm.slane %v422, 1
      %v547 = vperm.slane %v425, 0
      %v548 = vperm.slane %v425, 1
      %v549 = vperm.slane %v428, 0
      %v550 = vperm.slane %v428, 1
      %v551 = vperm.slane %v431, 0
      %v552 = vperm.slane %v431, 1
      %v553 = vperm.slane %v432, 0
      %v554 = vperm.slane %v432, 1
      %v555 = vperm.slane %v434, 0
      %v556 = vperm.slane %v434, 1
      %v557 = vperm.slane %v436, 0
      %v558 = vperm.slane %v436, 1
      %v559 = vperm.slane %v438, 0
      %v560 = vperm.slane %v438, 1
      %v561 = vperm.slane %v440, 0
      %v562 = vperm.slane %v440, 1
      %v563 = vperm.slane %v442, 0
      %v564 = vperm.slane %v442, 1
      %v565 = vperm.slane %v444, 0
      %v566 = vperm.slane %v444, 1
      %v567 = vperm.slane %v446, 0
      %v568 = vperm.slane %v446, 1
      %v569 = vperm.slane %v447, 0
      %v570 = vperm.slane %v447, 1
      %v571 = vperm.slane %v449, 0
      %v572 = vperm.slane %v449, 1
      %v573 = vperm.slane %v451, 0
      %v574 = vperm.slane %v451, 1
      %v575 = vperm.slane %v453, 0
      %v576 = vperm.slane %v453, 1
      %v577 = vperm.slane %v455, 0
      %v578 = vperm.slane %v455, 1
      %v579 = vperm.slane %v457, 0
      %v580 = vperm.slane %v457, 1
      %v581 = vperm.slane %v459, 0
      %v582 = vperm.slane %v459, 1
      %v583 = vperm.slane %v461, 0
      %v584 = vperm.slane %v461, 1
      %v585 = vperm.slane %v462, 0
      %v586 = vperm.slane %v462, 1
      %v587 = vperm.slane %v464, 0
      %v588 = vperm.slane %v464, 1
      %v589 = vperm.slane %v466, 0
      %v590 = vperm.slane %v466, 1
      %v591 = vperm.slane %v468, 0
      %v592 = vperm.slane %v468, 1
      %v593 = vperm.slane %v470, 0
      %v594 = vperm.slane %v470, 1
      %v595 = vperm.slane %v472, 0
      %v596 = vperm.slane %v472, 1
      %v597 = vperm.slane %v474, 0
      %v598 = vperm.slane %v474, 1
      %v599 = vperm.slane %v476, 0
      %v600 = vperm.slane %v476, 1
      %v601 = vperm.slane %v477, 0
      %v602 = vperm.slane %v477, 1
      %v603 = vperm.slane %v479, 0
      %v604 = vperm.slane %v479, 1
      %v605 = vperm.slane %v481, 0
      %v606 = vperm.slane %v481, 1
      %v607 = vperm.slane %v483, 0
      %v608 = vperm.slane %v483, 1
      %v609 = vperm.slane %v485, 0
      %v610 = vperm.slane %v485, 1
      %v611 = vperm.slane %v487, 0
      %v612 = vperm.slane %v487, 1
      %v613 = vperm.slane %v489, 0
      %v614 = vperm.slane %v489, 1
      %v615 = vperm.slane %v491, 0
      %v616 = vperm.slane %v491, 1
      %v617 = vperm.slane %v492, 0
      %v618 = vperm.slane %v492, 1
      %v619 = vperm.slane %v494, 0
      %v620 = vperm.slane %v494, 1
      %v621 = vperm.slane %v496, 0
      %v622 = vperm.slane %v496, 1
      %v623 = vperm.slane %v498, 0
      %v624 = vperm.slane %v498, 1
      %v625 = vperm.slane %v500, 0
      %v626 = vperm.slane %v500, 1
      %v627 = vperm.slane %v502, 0
      %v628 = vperm.slane %v502, 1
      %v629 = vperm.slane %v504, 0
      %v630 = vperm.slane %v504, 1
      %v631 = vperm.slane %v506, 0
      %v632 = vperm.slane %v506, 1
      %v633 = vperm.slane %v507, 0
      %v634 = vperm.slane %v507, 1
      %v635 = vperm.slane %v509, 0
      %v636 = vperm.slane %v509, 1
      %v637 = vperm.slane %v511, 0
      %v638 = vperm.slane %v511, 1
      %v639 = vperm.slane %v513, 0
      %v640 = vperm.slane %v513, 1
      %v641 = vperm.slane %v515, 0
      %v642 = vperm.slane %v515, 1
      %v643 = vperm.slane %v517, 0
      %v644 = vperm.slane %v517, 1
      %v645 = vperm.slane %v519, 0
      %v646 = vperm.slane %v519, 1
      %v647 = vperm.slane %v521, 0
      %v648 = vperm.slane %v521, 1
      %v649 = vperm.slane %v522, 0
      %v650 = vperm.slane %v522, 1
      %v651 = vperm.slane %v524, 0
      %v652 = vperm.slane %v524, 1
      %v653 = vperm.slane %v526, 0
      %v654 = vperm.slane %v526, 1
      %v655 = vperm.slane %v528, 0
      %v656 = vperm.slane %v528, 1
      %v657 = vperm.slane %v530, 0
      %v658 = vperm.slane %v530, 1
      %v659 = vperm.slane %v532, 0
      %v660 = vperm.slane %v532, 1
      %v661 = vperm.slane %v534, 0
      %v662 = vperm.slane %v534, 1
      %v663 = vperm.slane %v536, 0
      %v664 = vperm.slane %v536, 1
      %v665 = vrot.slane %v538, 6
      %v666 = vrot.slane %v540, 6
      %v667 = vrot.slane %v542, 6
      %v668 = vrot.slane %v544, 6
      %v669 = vrot.slane %v546, 6
      %v670 = vrot.slane %v548, 6
      %v671 = vrot.slane %v550, 6
      %v672 = vrot.slane %v552, 6
      %v673 = vrot.slane %v554, 6
      %v674 = vrot.slane %v556, 6
      %v675 = vrot.slane %v558, 6
      %v676 = vrot.slane %v560, 6
      %v677 = vrot.slane %v562, 6
      %v678 = vrot.slane %v564, 6
      %v679 = vrot.slane %v566, 6
      %v680 = vrot.slane %v568, 6
      %v681 = vrot.slane %v570, 6
      %v682 = vrot.slane %v572, 6
      %v683 = vrot.slane %v574, 6
      %v684 = vrot.slane %v576, 6
      %v685 = vrot.slane %v578, 6
      %v686 = vrot.slane %v580, 6
      %v687 = vrot.slane %v582, 6
      %v688 = vrot.slane %v584, 6
      %v689 = vrot.slane %v586, 6
      %v690 = vrot.slane %v588, 6
      %v691 = vrot.slane %v590, 6
      %v692 = vrot.slane %v592, 6
      %v693 = vrot.slane %v594, 6
      %v694 = vrot.slane %v596, 6
      %v695 = vrot.slane %v598, 6
      %v696 = vrot.slane %v600, 6
      %v697 = vrot.slane %v602, 6
      %v698 = vrot.slane %v604, 6
      %v699 = vrot.slane %v606, 6
      %v700 = vrot.slane %v608, 6
      %v701 = vrot.slane %v610, 6
      %v702 = vrot.slane %v612, 6
      %v703 = vrot.slane %v614, 6
      %v704 = vrot.slane %v616, 6
      %v705 = vrot.slane %v618, 6
      %v706 = vrot.slane %v620, 6
      %v707 = vrot.slane %v622, 6
      %v708 = vrot.slane %v624, 6
      %v709 = vrot.slane %v626, 6
      %v710 = vrot.slane %v628, 6
      %v711 = vrot.slane %v630, 6
      %v712 = vrot.slane %v632, 6
      %v713 = vrot.slane %v634, 6
      %v714 = vrot.slane %v636, 6
      %v715 = vrot.slane %v638, 6
      %v716 = vrot.slane %v640, 6
      %v717 = vrot.slane %v642, 6
      %v718 = vrot.slane %v644, 6
      %v719 = vrot.slane %v646, 6
      %v720 = vrot.slane %v648, 6
      %v721 = vrot.slane %v650, 6
      %v722 = vrot.slane %v652, 6
      %v723 = vrot.slane %v654, 6
      %v724 = vrot.slane %v656, 6
      %v725 = vrot.slane %v658, 6
      %v726 = vrot.slane %v660, 6
      %v727 = vrot.slane %v662, 6
      %v728 = vrot.slane %v664, 6
      %vm729 = vcmask 1041408
      %v730 = vsel %vm729, %v537, %v665
      %v731 = vsel %vm729, %v539, %v666
      %v732 = vsel %vm729, %v541, %v667
      %v733 = vsel %vm729, %v543, %v668
      %v734 = vsel %vm729, %v545, %v669
      %v735 = vsel %vm729, %v547, %v670
      %v736 = vsel %vm729, %v549, %v671
      %v737 = vsel %vm729, %v551, %v672
      %v738 = vsel %vm729, %v553, %v673
      %v739 = vsel %vm729, %v555, %v674
      %v740 = vsel %vm729, %v557, %v675
      %v741 = vsel %vm729, %v559, %v676
      %v742 = vsel %vm729, %v561, %v677
      %v743 = vsel %vm729, %v563, %v678
      %v744 = vsel %vm729, %v565, %v679
      %v745 = vsel %vm729, %v567, %v680
      %v746 = vsel %vm729, %v569, %v681
      %v747 = vsel %vm729, %v571, %v682
      %v748 = vsel %vm729, %v573, %v683
      %v749 = vsel %vm729, %v575, %v684
      %v750 = vsel %vm729, %v577, %v685
      %v751 = vsel %vm729, %v579, %v686
      %v752 = vsel %vm729, %v581, %v687
      %v753 = vsel %vm729, %v583, %v688
      %v754 = vsel %vm729, %v585, %v689
      %v755 = vsel %vm729, %v587, %v690
      %v756 = vsel %vm729, %v589, %v691
      %v757 = vsel %vm729, %v591, %v692
      %v758 = vsel %vm729, %v593, %v693
      %v759 = vsel %vm729, %v595, %v694
      %v760 = vsel %vm729, %v597, %v695
      %v761 = vsel %vm729, %v599, %v696
      %v762 = vsel %vm729, %v601, %v697
      %v763 = vsel %vm729, %v603, %v698
      %v764 = vsel %vm729, %v605, %v699
      %v765 = vsel %vm729, %v607, %v700
      %v766 = vsel %vm729, %v609, %v701
      %v767 = vsel %vm729, %v611, %v702
      %v768 = vsel %vm729, %v613, %v703
      %v769 = vsel %vm729, %v615, %v704
      %v770 = vsel %vm729, %v617, %v705
      %v771 = vsel %vm729, %v619, %v706
      %v772 = vsel %vm729, %v621, %v707
      %v773 = vsel %vm729, %v623, %v708
      %v774 = vsel %vm729, %v625, %v709
      %v775 = vsel %vm729, %v627, %v710
      %v776 = vsel %vm729, %v629, %v711
      %v777 = vsel %vm729, %v631, %v712
      %v778 = vsel %vm729, %v633, %v713
      %v779 = vsel %vm729, %v635, %v714
      %v780 = vsel %vm729, %v637, %v715
      %v781 = vsel %vm729, %v639, %v716
      %v782 = vsel %vm729, %v641, %v717
      %v783 = vsel %vm729, %v643, %v718
      %v784 = vsel %vm729, %v645, %v719
      %v785 = vsel %vm729, %v647, %v720
      %v786 = vsel %vm729, %v649, %v721
      %v787 = vsel %vm729, %v651, %v722
      %v788 = vsel %vm729, %v653, %v723
      %v789 = vsel %vm729, %v655, %v724
      %v790 = vsel %vm729, %v657, %v725
      %v791 = vsel %vm729, %v659, %v726
      %v792 = vsel %vm729, %v661, %v727
      %v793 = vsel %vm729, %v663, %v728
      %794 = vst [vmem:[#allocation1] ss:$4 sm:$0xff] %v730
      %s795 = scalar_lea.vmem [#allocation1], 1
      %796 = vst [vmem:[%s795] ss:$4 sm:$0xff] %v731
      %s797 = scalar_lea.vmem [#allocation1], 2
      %798 = vst [vmem:[%s797] ss:$4 sm:$0xff] %v732
      %s799 = scalar_lea.vmem [#allocation1], 3
      %800 = vst [vmem:[%s799] ss:$4 sm:$0xff] %v733
      %s801 = scalar_lea.vmem [#allocation1], 32
      %802 = vst [vmem:[%s801] ss:$4 sm:$0xff] %v734
      %s803 = scalar_lea.vmem [#allocation1], 33
      %804 = vst [vmem:[%s803] ss:$4 sm:$0xff] %v735
      %s805 = scalar_lea.vmem [#allocation1], 34
      %806 = vst [vmem:[%s805] ss:$4 sm:$0xff] %v736
      %s807 = scalar_lea.vmem [#allocation1], 35
      %808 = vst [vmem:[%s807] ss:$4 sm:$0xff] %v737
      %v809 = vld.sshfl [vmem:[#allocation1] sm:$0xff pattern:$0x73625140]
      %v810 = vld.sshfl [vmem:[#allocation1 + $0x8] sm:$0xff pattern:$0x73625140]
      %v811 = vld.sshfl [vmem:[#allocation1 + $0x20] sm:$0xff pattern:$0x73625140]
      %v812 = vld.sshfl [vmem:[#allocation1 + $0x28] sm:$0xff pattern:$0x73625140]
      %813 = vst [vmem:[#allocation1] ss:$4 sm:$0xff] %v738
      %814 = vst [vmem:[%s795] ss:$4 sm:$0xff] %v739
      %815 = vst [vmem:[%s797] ss:$4 sm:$0xff] %v740
      %816 = vst [vmem:[%s799] ss:$4 sm:$0xff] %v741
      %817 = vst [vmem:[%s801] ss:$4 sm:$0xff] %v742
      %818 = vst [vmem:[%s803] ss:$4 sm:$0xff] %v743
      %819 = vst [vmem:[%s805] ss:$4 sm:$0xff] %v744
      %820 = vst [vmem:[%s807] ss:$4 sm:$0xff] %v745
      %v821 = vld.sshfl [vmem:[#allocation1] sm:$0xff pattern:$0x73625140]
      %v822 = vld.sshfl [vmem:[#allocation1 + $0x8] sm:$0xff pattern:$0x73625140]
      %v823 = vld.sshfl [vmem:[#allocation1 + $0x20] sm:$0xff pattern:$0x73625140]
      %v824 = vld.sshfl [vmem:[#allocation1 + $0x28] sm:$0xff pattern:$0x73625140]
      %825 = vst [vmem:[#allocation1] ss:$4 sm:$0xff] %v746
      %826 = vst [vmem:[%s795] ss:$4 sm:$0xff] %v747
      %827 = vst [vmem:[%s797] ss:$4 sm:$0xff] %v748
      %828 = vst [vmem:[%s799] ss:$4 sm:$0xff] %v749
      %829 = vst [vmem:[%s801] ss:$4 sm:$0xff] %v750
      %830 = vst [vmem:[%s803] ss:$4 sm:$0xff] %v751
      %831 = vst [vmem:[%s805] ss:$4 sm:$0xff] %v752
      %832 = vst [vmem:[%s807] ss:$4 sm:$0xff] %v753
      %v833 = vld.sshfl [vmem:[#allocation1] sm:$0xff pattern:$0x73625140]
      %v834 = vld.sshfl [vmem:[#allocation1 + $0x8] sm:$0xff pattern:$0x73625140]
      %v835 = vld.sshfl [vmem:[#allocation1 + $0x20] sm:$0xff pattern:$0x73625140]
      %v836 = vld.sshfl [vmem:[#allocation1 + $0x28] sm:$0xff pattern:$0x73625140]
      %837 = vst [vmem:[#allocation1] ss:$4 sm:$0xff] %v754
      %838 = vst [vmem:[%s795] ss:$4 sm:$0xff] %v755
      %839 = vst [vmem:[%s797] ss:$4 sm:$0xff] %v756
      %840 = vst [vmem:[%s799] ss:$4 sm:$0xff] %v757
      %841 = vst [vmem:[%s801] ss:$4 sm:$0xff] %v758
      %842 = vst [vmem:[%s803] ss:$4 sm:$0xff] %v759
      %843 = vst [vmem:[%s805] ss:$4 sm:$0xff] %v760
      %844 = vst [vmem:[%s807] ss:$4 sm:$0xff] %v761
      %v845 = vld.sshfl [vmem:[#allocation1] sm:$0xff pattern:$0x73625140]
      %v846 = vld.sshfl [vmem:[#allocation1 + $0x8] sm:$0xff pattern:$0x73625140]
      %v847 = vld.sshfl [vmem:[#allocation1 + $0x20] sm:$0xff pattern:$0x73625140]
      %v848 = vld.sshfl [vmem:[#allocation1 + $0x28] sm:$0xff pattern:$0x73625140]
      %849 = vst [vmem:[#allocation1] ss:$4 sm:$0xff] %v762
      %850 = vst [vmem:[%s795] ss:$4 sm:$0xff] %v763
      %851 = vst [vmem:[%s797] ss:$4 sm:$0xff] %v764
      %852 = vst [vmem:[%s799] ss:$4 sm:$0xff] %v765
      %853 = vst [vmem:[%s801] ss:$4 sm:$0xff] %v766
      %854 = vst [vmem:[%s803] ss:$4 sm:$0xff] %v767
      %855 = vst [vmem:[%s805] ss:$4 sm:$0xff] %v768
      %856 = vst [vmem:[%s807] ss:$4 sm:$0xff] %v769
      %v857 = vld.sshfl [vmem:[#allocation1] sm:$0xff pattern:$0x73625140]
      %v858 = vld.sshfl [vmem:[#allocation1 + $0x8] sm:$0xff pattern:$0x73625140]
      %v859 = vld.sshfl [vmem:[#allocation1 + $0x20] sm:$0xff pattern:$0x73625140]
      %v860 = vld.sshfl [vmem:[#allocation1 + $0x28] sm:$0xff pattern:$0x73625140]
      %861 = vst [vmem:[#allocation1] ss:$4 sm:$0xff] %v770
      %862 = vst [vmem:[%s795] ss:$4 sm:$0xff] %v771
      %863 = vst [vmem:[%s797] ss:$4 sm:$0xff] %v772
      %864 = vst [vmem:[%s799] ss:$4 sm:$0xff] %v773
      %865 = vst [vmem:[%s801] ss:$4 sm:$0xff] %v774
      %866 = vst [vmem:[%s803] ss:$4 sm:$0xff] %v775
      %867 = vst [vmem:[%s805] ss:$4 sm:$0xff] %v776
      %868 = vst [vmem:[%s807] ss:$4 sm:$0xff] %v777
      %v869 = vld.sshfl [vmem:[#allocation1] sm:$0xff pattern:$0x73625140]
      %v870 = vld.sshfl [vmem:[#allocation1 + $0x8] sm:$0xff pattern:$0x73625140]
      %v871 = vld.sshfl [vmem:[#allocation1 + $0x20] sm:$0xff pattern:$0x73625140]
      %v872 = vld.sshfl [vmem:[#allocation1 + $0x28] sm:$0xff pattern:$0x73625140]
      %873 = vst [vmem:[#allocation1] ss:$4 sm:$0xff] %v778
      %874 = vst [vmem:[%s795] ss:$4 sm:$0xff] %v779
      %875 = vst [vmem:[%s797] ss:$4 sm:$0xff] %v780
      %876 = vst [vmem:[%s799] ss:$4 sm:$0xff] %v781
      %877 = vst [vmem:[%s801] ss:$4 sm:$0xff] %v782
      %878 = vst [vmem:[%s803] ss:$4 sm:$0xff] %v783
      %879 = vst [vmem:[%s805] ss:$4 sm:$0xff] %v784
      %880 = vst [vmem:[%s807] ss:$4 sm:$0xff] %v785
      %v881 = vld.sshfl [vmem:[#allocation1] sm:$0xff pattern:$0x73625140]
      %v882 = vld.sshfl [vmem:[#allocation1 + $0x8] sm:$0xff pattern:$0x73625140]
      %v883 = vld.sshfl [vmem:[#allocation1 + $0x20] sm:$0xff pattern:$0x73625140]
      %v884 = vld.sshfl [vmem:[#allocation1 + $0x28] sm:$0xff pattern:$0x73625140]
      %885 = vst [vmem:[#allocation1] ss:$4 sm:$0xff] %v786
      %886 = vst [vmem:[%s795] ss:$4 sm:$0xff] %v787
      %887 = vst [vmem:[%s797] ss:$4 sm:$0xff] %v788
      %888 = vst [vmem:[%s799] ss:$4 sm:$0xff] %v789
      %889 = vst [vmem:[%s801] ss:$4 sm:$0xff] %v790
      %890 = vst [vmem:[%s803] ss:$4 sm:$0xff] %v791
      %891 = vst [vmem:[%s805] ss:$4 sm:$0xff] %v792
      %892 = vst [vmem:[%s807] ss:$4 sm:$0xff] %v793
      %v893 = vld.sshfl [vmem:[#allocation1] sm:$0xff pattern:$0x73625140]
      %v894 = vld.sshfl [vmem:[#allocation1 + $0x8] sm:$0xff pattern:$0x73625140]
      %v895 = vld.sshfl [vmem:[#allocation1 + $0x20] sm:$0xff pattern:$0x73625140]
      %v896 = vld.sshfl [vmem:[#allocation1 + $0x28] sm:$0xff pattern:$0x73625140]
      %929 = vst [vmem:[%s197] sm:$0xff] %v809
      %930 = vst [vmem:[%s197 + $0x8] sm:$0xff] %v810
      %931 = vst [vmem:[%s197 + $0x10] sm:$0xff] %v811
      %932 = vst [vmem:[%s197 + $0x18] sm:$0xff] %v812
      %933 = vst [vmem:[%s197 + $0x20] sm:$0xff] %v821
      %934 = vst [vmem:[%s197 + $0x28] sm:$0xff] %v822
      %935 = vst [vmem:[%s197 + $0x30] sm:$0xff] %v823
      %936 = vst [vmem:[%s197 + $0x38] sm:$0xff] %v824
      %937 = vst [vmem:[%s197 + $0x40] sm:$0xff] %v833
      %938 = vst [vmem:[%s197 + $0x48] sm:$0xff] %v834
      %939 = vst [vmem:[%s197 + $0x50] sm:$0xff] %v835
      %940 = vst [vmem:[%s197 + $0x58] sm:$0xff] %v836
      %941 = vst [vmem:[%s197 + $0x60] sm:$0xff] %v845
      %942 = vst [vmem:[%s197 + $0x68] sm:$0xff] %v846
      %943 = vst [vmem:[%s197 + $0x70] sm:$0xff] %v847
      %944 = vst [vmem:[%s197 + $0x78] sm:$0xff] %v848
      %945 = vst [vmem:[%s197 + $0x80] sm:$0xff] %v857
      %946 = vst [vmem:[%s197 + $0x88] sm:$0xff] %v858
      %947 = vst [vmem:[%s197 + $0x90] sm:$0xff] %v859
      %948 = vst [vmem:[%s197 + $0x98] sm:$0xff] %v860
      %949 = vst [vmem:[%s197 + $0xa0] sm:$0xff] %v869
      %950 = vst [vmem:[%s197 + $0xa8] sm:$0xff] %v870
      %951 = vst [vmem:[%s197 + $0xb0] sm:$0xff] %v871
      %952 = vst [vmem:[%s197 + $0xb8] sm:$0xff] %v872
      %953 = vst [vmem:[%s197 + $0xc0] sm:$0xff] %v881
      %954 = vst [vmem:[%s197 + $0xc8] sm:$0xff] %v882
      %955 = vst [vmem:[%s197 + $0xd0] sm:$0xff] %v883
      %956 = vst [vmem:[%s197 + $0xd8] sm:$0xff] %v884
      %957 = vst [vmem:[%s197 + $0xe0] sm:$0xff] %v893
      %958 = vst [vmem:[%s197 + $0xe8] sm:$0xff] %v894
      %959 = vst [vmem:[%s197 + $0xf0] sm:$0xff] %v895
      %960 = vst [vmem:[%s197 + $0xf8] sm:$0xff] %v896
      %p961 = scmp.lt.s32.totalorder %s15, 1
      %s962 = scalar_select %p961, %s15, 1
      %s963 = smul.addr %s962, 32
      %s964 = smul.addr %s963, 8
      %s965 = scalar_lea.vmem %s4, %s964
      // Predicated region
      $region37: #{single_conv_up_forward.3} parent=35 // pred_check
        %p966 = pneg %p122
      $region38: #{single_conv_up_forward.3} parent=35 // pred_check_branch
        %968 = sbr.rel (%p966) target = $region40
      $region39: #{single_conv_up_forward.3} parent=35 // pred_region
        _
      $region40: #{single_conv_up_forward.3} parent=35 // pred_fallthru
        _
    $region36: #{single_conv_up_forward.3} parent=5 // pred_fallthru
      _
    %p969 = scmp.le.s32.totalorder 2, %s10
    // Predicated region
    $region41: #{single_conv_up_forward.3} parent=5 // pred_check
      %p970 = pneg %p969
    $region42: #{single_conv_up_forward.3} parent=5 // pred_check_branch
      %972 = sbr.rel (%p970) target = $region44
    $region43: #{single_conv_up_forward.3} parent=5 // pred_region
      %s973 = ssub.s32 %s10, 2
      // Predicated region
      $region45: #{single_conv_up_forward.3} parent=43 // pred_check
        %p974 = pneg %p128
      $region46: #{single_conv_up_forward.3} parent=43 // pred_check_branch
        %976 = sbr.rel (%p974) target = $region48
      $region47: #{single_conv_up_forward.3} parent=43 // pred_region
        %p977 = scmp.lt.s32.totalorder %s16, 1
        %s978 = scalar_select %p977, %s16, 1
        %s979 = smul.addr %s978, 32
        %s980 = smul.addr %s979, 8
        %s981 = scalar_lea.vmem %s4, %s980
      $region48: #{single_conv_up_forward.3} parent=43 // pred_fallthru
        _
    $region44: #{single_conv_up_forward.3} parent=5 // pred_fallthru
      _
  $region6: #{single_conv_up_forward.3} parent=0 // loop_footer
    %s14 = sadd.s32 1, %s10
  $region7: #{single_conv_up_forward.3} parent=0 // loop_footer_branch
    %9 = sbr.rel target = $region3
  $region8: #{single_conv_up_forward.3} parent=0 // loop_exit
    _

</llo_original>
